<compile_context>
chip_gen: v7x
topology: tpu7x:2x2x1
jax: 0.10.0
libtpu: 0.0.40
codegen_flags: <defaults>
</compile_context>

<pallas_src>
import functools

import jax
import jax.numpy as jnp
from jax.experimental import pallas as pl
from jax.experimental.pallas import tpu as pltpu

# ----------------------- model hyper-parameters (from YOLO.__init__ defaults) -----------------------
STRIDES = [8, 16, 32]
ANCHOR_GRIDS = [
    [10.0, 13.0, 16.0, 30.0, 33.0, 23.0],
    [30.0, 61.0, 62.0, 45.0, 59.0, 119.0],
    [116.0, 90.0, 156.0, 198.0, 373.0, 326.0],
]
NUM_ANCHORS = len(ANCHOR_GRIDS[0]) // 2        # 3
NUM_CLASSES = 3                                # small synthetic class count
K = NUM_CLASSES + 5                            # per-anchor outputs (x, y, w, h, obj, cls...)
OUT_CHANNELS = 32                              # backbone.out_channels (same for all levels)
SCORE_THRESH = 0.005
DETECTIONS_PER_IMG = 300


# ----------------------------------- fused per-level Pallas kernel ----------------------------------
def _level_kernel(patch_ref, grid_ref, wb_ref, bb_ref, wh_ref, bh_ref,
                  boxes_ref, scores_ref, *, stride, anchors):
    """Backbone patch-conv + SiLU + YOLOHead 1x1 conv + sigmoid + YOLOv5 decode, one row tile."""
    x = patch_ref[...]                                                    # [TM, P] bf16
    feat = jnp.dot(x, wb_ref[...], preferred_element_type=jnp.float32) + bb_ref[...]
    feat = feat * jax.nn.sigmoid(feat)                                    # SiLU in f32
    logits = jnp.dot(feat.astype(jnp.bfloat16), wh_ref[...],
                     preferred_element_type=jnp.float32) + bh_ref[...]    # [TM, A*K] f32
    s = jax.nn.sigmoid(logits)

    gx = grid_ref[:, 0:1]                                                 # (cell_x - 0.5) * stride
    gy = grid_ref[:, 1:2]                                                 # (cell_y - 0.5) * stride
    two_s = 2.0 * stride

    box_cols, score_cols = [], []
    for a in range(NUM_ANCHORS):                                          # A=3, unrolled at trace
        b0 = a * K
        aw, ah = anchors[a]                                               # Python scalar constants
        cx = s[:, b0 + 0:b0 + 1] * two_s + gx
        cy = s[:, b0 + 1:b0 + 2] * two_s + gy
        pw = jnp.square(s[:, b0 + 2:b0 + 3] * 2.0) * aw
        ph = jnp.square(s[:, b0 + 3:b0 + 4] * 2.0) * ah
        box_cols += [cx - 0.5 * pw, cy - 0.5 * ph, cx + 0.5 * pw, cy + 0.5 * ph]
        score_cols.append(s[:, b0 + 5:b0 + K] * s[:, b0 + 4:b0 + 5])      # cls * obj
    boxes_ref[...] = jnp.concatenate(box_cols, axis=-1)                   # [TM, A*4] xyxy
    scores_ref[...] = jnp.concatenate(score_cols, axis=-1)                # [TM, A*NC]


def _choose_tm(m):
    """Row tile: 512 for big levels (pipelined, multi-core), single padded block for tiny ones."""
    if m >= 512:
        return 512
    return ((m + 7) // 8) * 8


def _run_level(patches, grid_scaled, wb, bb, wh, bh, *, stride, anchors, tm):
    m_pad, p = patches.shape
    a4 = NUM_ANCHORS * 4
    anc = NUM_ANCHORS * NUM_CLASSES
    kernel = functools.partial(_level_kernel, stride=float(stride), anchors=anchors)

    flops = 2 * m_pad * p * OUT_CHANNELS + 2 * m_pad * OUT_CHANNELS * (NUM_ANCHORS * K)
    transcendentals = m_pad * (OUT_CHANNELS + NUM_ANCHORS * K)            # SiLU + decode sigmoids
    bytes_accessed = (m_pad * p * 2 + m_pad * 2 * 4                       # patches (bf16) + grid (f32)
                      + p * OUT_CHANNELS * 2 + OUT_CHANNELS * NUM_ANCHORS * K * 2
                      + (OUT_CHANNELS + NUM_ANCHORS * K) * 4
                      + m_pad * (a4 + anc) * 4)                           # outputs (f32)

    return pl.pallas_call(
        kernel,
        grid=(m_pad // tm,),
        in_specs=[
            pl.BlockSpec((tm, p), lambda i: (i, 0)),                      # patches (row-tiled)
            pl.BlockSpec((tm, 2), lambda i: (i, 0)),                      # pre-scaled cell grid
            pl.BlockSpec((p, OUT_CHANNELS), lambda i: (0, 0)),            # backbone weight (resident)
            pl.BlockSpec((1, OUT_CHANNELS), lambda i: (0, 0)),
            pl.BlockSpec((OUT_CHANNELS, NUM_ANCHORS * K), lambda i: (0, 0)),
            pl.BlockSpec((1, NUM_ANCHORS * K), lambda i: (0, 0)),
        ],
        out_specs=(pl.BlockSpec((tm, a4), lambda i: (i, 0)),
                   pl.BlockSpec((tm, anc), lambda i: (i, 0))),
        out_shape=(jax.ShapeDtypeStruct((m_pad, a4), jnp.float32),
                   jax.ShapeDtypeStruct((m_pad, anc), jnp.float32)),
        compiler_params=pltpu.CompilerParams(
            dimension_semantics=("parallel",),                            # shardable over TCs (v7x)
            vmem_limit_bytes=32 * 1024 * 1024),                           # tile sized to fit v7x budget
        cost_estimate=pl.CostEstimate(flops=flops, transcendentals=transcendentals,
                                      bytes_accessed=bytes_accessed),
    )(patches, grid_scaled, wb, bb, wh, bh)


# ---------------------------------------- YOLO forward ----------------------------------------------
def yolo_forward(params, samples_nchw):
    n, c, hh, ww = samples_nchw.shape
    x = jnp.transpose(samples_nchw, (0, 2, 3, 1)).astype(jnp.float32)     # NCHW -> NHWC

    boxes_levels, scores_levels = [], []
    for i, s in enumerate(STRIDES):
        h, w = hh // s, ww // s
        m = n * h * w
        # stride-s, kernel-s conv == non-overlapping patch extraction + matmul (glue reshape)
        patches = (x.reshape(n, h, s, w, s, c)
                     .transpose(0, 1, 3, 2, 4, 5)
                     .reshape(m, s * s * c)).astype(jnp.bfloat16)         # bf16 for the MXU path

        # AnchorGenerator grid, folded into one pre-scaled per-row (x, y) table: (cell - 0.5)*stride
        ys = jnp.arange(h, dtype=jnp.float32)
        xs = jnp.arange(w, dtype=jnp.float32)
        shift_y, shift_x = jnp.meshgrid(ys, xs, indexing="ij")
        cell = jnp.stack((shift_x, shift_y), axis=-1).reshape(h * w, 2)   # (h*w, 2) as (x, y)
        grid_scaled = (cell - 0.5) * float(s)
        grid_scaled = jnp.broadcast_to(grid_scaled[None], (n, h * w, 2)).reshape(m, 2)

        tm = _choose_tm(m)
        m_pad = ((m + tm - 1) // tm) * tm
        if m_pad != m:
            patches = jnp.pad(patches, ((0, m_pad - m), (0, 0)))
            grid_scaled = jnp.pad(grid_scaled, ((0, m_pad - m), (0, 0)))

        anchors = tuple(tuple(ANCHOR_GRIDS[i][2 * a:2 * a + 2]) for a in range(NUM_ANCHORS))
        boxes_l, scores_l = _run_level(
            patches, grid_scaled,
            params[f"wb{i}"].astype(jnp.bfloat16), params[f"bb{i}"],
            params[f"wh{i}"].astype(jnp.bfloat16), params[f"bh{i}"],
            stride=s, anchors=anchors, tm=tm)

        # reorder rows/anchors to match PyTorch's (N, A, h, w, ...) -> (N, A*h*w, ...) flattening
        boxes_l = (boxes_l[:m].reshape(n, h, w, NUM_ANCHORS, 4)
                   .transpose(0, 3, 1, 2, 4).reshape(n, -1, 4))
        scores_l = (scores_l[:m].reshape(n, h, w, NUM_ANCHORS, NUM_CLASSES)
                    .transpose(0, 3, 1, 2, 4).reshape(n, -1, NUM_CLASSES))
        boxes_levels.append(boxes_l)
        scores_levels.append(scores_l)

    boxes = jnp.concatenate(boxes_levels, axis=1)                         # (N, T, 4)
    scores = jnp.concatenate(scores_levels, axis=1)                       # (N, T, num_classes)

    # PostProcess tail: score threshold + per-image top-k, vmapped over the batch.
    # TODO(synk): batched NMS produces dynamic-shaped outputs; no clean static-shape Pallas/TPU
    # equivalent, so detections below threshold are padded with score=-1 instead of dropped.
    def _select_topk(boxes_i, scores_i):
        sc = scores_i.reshape(-1)                                         # (T * num_classes,)
        sc = jnp.where(sc > SCORE_THRESH, sc, -1.0)
        k_keep = min(DETECTIONS_PER_IMG, sc.shape[0])
        top_scores, top_idx = jax.lax.top_k(sc, k_keep)
        det_boxes = boxes_i[top_idx // NUM_CLASSES]
        det_labels = (top_idx % NUM_CLASSES).astype(jnp.int32)
        return det_boxes, top_scores, det_labels

    det_boxes, det_scores, det_labels = jax.vmap(_select_topk)(boxes, scores)
    return [{"boxes": det_boxes[b], "scores": det_scores[b], "labels": det_labels[b]}
            for b in range(n)]


# ------------------------------------- deterministic parameters -------------------------------------
def init_params(key):
    params = {}
    for i, s in enumerate(STRIDES):
        p_in = s * s * 3
        key, k1, k2, k3, k4 = jax.random.split(key, 5)
        params[f"wb{i}"] = 0.05 * jax.random.normal(k1, (p_in, OUT_CHANNELS), jnp.float32)
        params[f"bb{i}"] = 0.01 * jax.random.normal(k2, (1, OUT_CHANNELS), jnp.float32)
        params[f"wh{i}"] = 0.05 * jax.random.normal(k3, (OUT_CHANNELS, NUM_ANCHORS * K), jnp.float32)
        params[f"bh{i}"] = 0.01 * jax.random.normal(k4, (1, NUM_ANCHORS * K), jnp.float32)
    return params


if __name__ == "__main__":
    root = jax.random.PRNGKey(0)
    pkey, xkey = jax.random.split(root)
    params = init_params(pkey)
    # batched images in [0, 1], NCHW like the PyTorch module expects
    samples = jax.random.uniform(xkey, (2, 3, 64, 64), jnp.float32)
    detections = yolo_forward(params, samples)
    for det in detections:
        jax.block_until_ready(det["boxes"])
        jax.block_until_ready(det["scores"])
        jax.block_until_ready(det["labels"])
    assert detections[0]["boxes"].shape == (DETECTIONS_PER_IMG, 4)
    assert detections[0]["scores"].shape == (DETECTIONS_PER_IMG,)
    assert detections[0]["labels"].shape == (DETECTIONS_PER_IMG,)
    print("KERNEL_OK")
</pallas_src>

<mosaic_0001>
module attributes {stable_mosaic.version = 11 : i64} {
  func.func @_level_kernel(%arg0: i32, %arg1: memref<128x192xbf16, #tpu.memory_space<vmem>>, %arg2: memref<128x2xf32, #tpu.memory_space<vmem>>, %arg3: memref<192x32xbf16, #tpu.memory_space<vmem>>, %arg4: memref<1x32xf32, #tpu.memory_space<vmem>>, %arg5: memref<32x24xbf16, #tpu.memory_space<vmem>>, %arg6: memref<1x24xf32, #tpu.memory_space<vmem>>, %arg7: memref<128x12xf32, #tpu.memory_space<vmem>>, %arg8: memref<128x9xf32, #tpu.memory_space<vmem>>) attributes {dimension_semantics = [#tpu.dimension_semantics<parallel>], iteration_bounds = array<i64: 1>, scalar_prefetch = 0 : i64, scratch_operands = 0 : i64, tpu.core_type = #tpu.core_type<tc>, window_params = [{transform_indices = @transform_0, window_bounds = array<i64: 128, 192>}, {transform_indices = @transform_1, window_bounds = array<i64: 128, 2>}, {pipeline_mode = #tpu.pipeline_mode<synchronous>, transform_indices = @transform_2, window_bounds = array<i64: 192, 32>}, {pipeline_mode = #tpu.pipeline_mode<synchronous>, transform_indices = @transform_3, window_bounds = array<i64: 1, 32>}, {pipeline_mode = #tpu.pipeline_mode<synchronous>, transform_indices = @transform_4, window_bounds = array<i64: 32, 24>}, {pipeline_mode = #tpu.pipeline_mode<synchronous>, transform_indices = @transform_5, window_bounds = array<i64: 1, 24>}, {transform_indices = @transform_6, window_bounds = array<i64: 128, 12>}, {transform_indices = @transform_7, window_bounds = array<i64: 128, 9>}]} {
    %c0 = arith.constant 0 : index
    %c0_0 = arith.constant 0 : index
    %0 = vector.load %arg1[%c0, %c0_0] : memref<128x192xbf16, #tpu.memory_space<vmem>>, vector<128x192xbf16>
    %c0_1 = arith.constant 0 : index
    %c0_2 = arith.constant 0 : index
    %1 = vector.load %arg3[%c0_1, %c0_2] : memref<192x32xbf16, #tpu.memory_space<vmem>>, vector<192x32xbf16>
    %cst = arith.constant dense<0.000000e+00> : vector<128x32xf32>
    %2 = tpu.matmul %0, %1, %cst {dimension_numbers = #tpu.dot_dimension_numbers<[1], [0], [0], [1], [0, 0, 1, 1], [], []>} : vector<128x192xbf16>, vector<192x32xbf16>, vector<128x32xf32> -> vector<128x32xf32>
    %c0_3 = arith.constant 0 : index
    %c0_4 = arith.constant 0 : index
    %3 = vector.load %arg4[%c0_3, %c0_4] : memref<1x32xf32, #tpu.memory_space<vmem>>, vector<1x32xf32>
    %4 = vector.broadcast %3 : vector<1x32xf32> to vector<128x32xf32>
    %5 = arith.addf %2, %4 : vector<128x32xf32>
    %6 = arith.negf %5 : vector<128x32xf32>
    %7 = math.exp %6 : vector<128x32xf32>
    %cst_5 = arith.constant 1.000000e+00 : f32
    %8 = vector.broadcast %cst_5 : f32 to vector<128x32xf32>
    %9 = arith.addf %8, %7 : vector<128x32xf32>
    %10 = arith.divf %8, %9 : vector<128x32xf32>
    %11 = arith.mulf %5, %10 : vector<128x32xf32>
    %12 = arith.truncf %11 : vector<128x32xf32> to vector<128x32xbf16>
    %c0_6 = arith.constant 0 : index
    %c0_7 = arith.constant 0 : index
    %13 = vector.load %arg5[%c0_6, %c0_7] : memref<32x24xbf16, #tpu.memory_space<vmem>>, vector<32x24xbf16>
    %cst_8 = arith.constant dense<0.000000e+00> : vector<128x24xf32>
    %14 = tpu.matmul %12, %13, %cst_8 {dimension_numbers = #tpu.dot_dimension_numbers<[1], [0], [0], [1], [0, 0, 1, 1], [], []>} : vector<128x32xbf16>, vector<32x24xbf16>, vector<128x24xf32> -> vector<128x24xf32>
    %c0_9 = arith.constant 0 : index
    %c0_10 = arith.constant 0 : index
    %15 = vector.load %arg6[%c0_9, %c0_10] : memref<1x24xf32, #tpu.memory_space<vmem>>, vector<1x24xf32>
    %16 = vector.broadcast %15 : vector<1x24xf32> to vector<128x24xf32>
    %17 = arith.addf %14, %16 : vector<128x24xf32>
    %18 = arith.negf %17 : vector<128x24xf32>
    %19 = math.exp %18 : vector<128x24xf32>
    %cst_11 = arith.constant 1.000000e+00 : f32
    %20 = vector.broadcast %cst_11 : f32 to vector<128x24xf32>
    %21 = arith.addf %20, %19 : vector<128x24xf32>
    %22 = arith.divf %20, %21 : vector<128x24xf32>
    %c0_12 = arith.constant 0 : index
    %c0_13 = arith.constant 0 : index
    %23 = vector.load %arg2[%c0_12, %c0_13] : memref<128x2xf32, #tpu.memory_space<vmem>>, vector<128x1xf32>
    %c0_14 = arith.constant 0 : index
    %c1 = arith.constant 1 : index
    %24 = vector.load %arg2[%c0_14, %c1] : memref<128x2xf32, #tpu.memory_space<vmem>>, vector<128x1xf32>
    %25 = vector.extract_strided_slice %22 {offsets = [0, 0], sizes = [128, 1], strides = [1, 1]} : vector<128x24xf32> to vector<128x1xf32>
    %cst_15 = arith.constant 1.600000e+01 : f32
    %26 = vector.broadcast %cst_15 : f32 to vector<128x1xf32>
    %27 = arith.mulf %25, %26 : vector<128x1xf32>
    %28 = arith.addf %27, %23 : vector<128x1xf32>
    %29 = vector.extract_strided_slice %22 {offsets = [0, 1], sizes = [128, 1], strides = [1, 1]} : vector<128x24xf32> to vector<128x1xf32>
    %cst_16 = arith.constant 1.600000e+01 : f32
    %30 = vector.broadcast %cst_16 : f32 to vector<128x1xf32>
    %31 = arith.mulf %29, %30 : vector<128x1xf32>
    %32 = arith.addf %31, %24 : vector<128x1xf32>
    %33 = vector.extract_strided_slice %22 {offsets = [0, 2], sizes = [128, 1], strides = [1, 1]} : vector<128x24xf32> to vector<128x1xf32>
    %cst_17 = arith.constant 2.000000e+00 : f32
    %34 = vector.broadcast %cst_17 : f32 to vector<128x1xf32>
    %35 = arith.mulf %33, %34 : vector<128x1xf32>
    %36 = arith.mulf %35, %35 : vector<128x1xf32>
    %cst_18 = arith.constant 1.000000e+01 : f32
    %37 = vector.broadcast %cst_18 : f32 to vector<128x1xf32>
    %38 = arith.mulf %36, %37 : vector<128x1xf32>
    %39 = vector.extract_strided_slice %22 {offsets = [0, 3], sizes = [128, 1], strides = [1, 1]} : vector<128x24xf32> to vector<128x1xf32>
    %cst_19 = arith.constant 2.000000e+00 : f32
    %40 = vector.broadcast %cst_19 : f32 to vector<128x1xf32>
    %41 = arith.mulf %39, %40 : vector<128x1xf32>
    %42 = arith.mulf %41, %41 : vector<128x1xf32>
    %cst_20 = arith.constant 1.300000e+01 : f32
    %43 = vector.broadcast %cst_20 : f32 to vector<128x1xf32>
    %44 = arith.mulf %42, %43 : vector<128x1xf32>
    %cst_21 = arith.constant 5.000000e-01 : f32
    %45 = vector.broadcast %cst_21 : f32 to vector<128x1xf32>
    %46 = arith.mulf %45, %38 : vector<128x1xf32>
    %47 = arith.subf %28, %46 : vector<128x1xf32>
    %cst_22 = arith.constant 5.000000e-01 : f32
    %48 = vector.broadcast %cst_22 : f32 to vector<128x1xf32>
    %49 = arith.mulf %48, %44 : vector<128x1xf32>
    %50 = arith.subf %32, %49 : vector<128x1xf32>
    %cst_23 = arith.constant 5.000000e-01 : f32
    %51 = vector.broadcast %cst_23 : f32 to vector<128x1xf32>
    %52 = arith.mulf %51, %38 : vector<128x1xf32>
    %53 = arith.addf %28, %52 : vector<128x1xf32>
    %cst_24 = arith.constant 5.000000e-01 : f32
    %54 = vector.broadcast %cst_24 : f32 to vector<128x1xf32>
    %55 = arith.mulf %54, %44 : vector<128x1xf32>
    %56 = arith.addf %32, %55 : vector<128x1xf32>
    %57 = vector.extract_strided_slice %22 {offsets = [0, 5], sizes = [128, 3], strides = [1, 1]} : vector<128x24xf32> to vector<128x3xf32>
    %58 = vector.extract_strided_slice %22 {offsets = [0, 4], sizes = [128, 1], strides = [1, 1]} : vector<128x24xf32> to vector<128x1xf32>
    %59 = vector.broadcast %58 : vector<128x1xf32> to vector<128x3xf32>
    %60 = arith.mulf %57, %59 : vector<128x3xf32>
    %61 = vector.extract_strided_slice %22 {offsets = [0, 8], sizes = [128, 1], strides = [1, 1]} : vector<128x24xf32> to vector<128x1xf32>
    %cst_25 = arith.constant 1.600000e+01 : f32
    %62 = vector.broadcast %cst_25 : f32 to vector<128x1xf32>
    %63 = arith.mulf %61, %62 : vector<128x1xf32>
    %64 = arith.addf %63, %23 : vector<128x1xf32>
    %65 = vector.extract_strided_slice %22 {offsets = [0, 9], sizes = [128, 1], strides = [1, 1]} : vector<128x24xf32> to vector<128x1xf32>
    %cst_26 = arith.constant 1.600000e+01 : f32
    %66 = vector.broadcast %cst_26 : f32 to vector<128x1xf32>
    %67 = arith.mulf %65, %66 : vector<128x1xf32>
    %68 = arith.addf %67, %24 : vector<128x1xf32>
    %69 = vector.extract_strided_slice %22 {offsets = [0, 10], sizes = [128, 1], strides = [1, 1]} : vector<128x24xf32> to vector<128x1xf32>
    %cst_27 = arith.constant 2.000000e+00 : f32
    %70 = vector.broadcast %cst_27 : f32 to vector<128x1xf32>
    %71 = arith.mulf %69, %70 : vector<128x1xf32>
    %72 = arith.mulf %71, %71 : vector<128x1xf32>
    %cst_28 = arith.constant 1.600000e+01 : f32
    %73 = vector.broadcast %cst_28 : f32 to vector<128x1xf32>
    %74 = arith.mulf %72, %73 : vector<128x1xf32>
    %75 = vector.extract_strided_slice %22 {offsets = [0, 11], sizes = [128, 1], strides = [1, 1]} : vector<128x24xf32> to vector<128x1xf32>
    %cst_29 = arith.constant 2.000000e+00 : f32
    %76 = vector.broadcast %cst_29 : f32 to vector<128x1xf32>
    %77 = arith.mulf %75, %76 : vector<128x1xf32>
    %78 = arith.mulf %77, %77 : vector<128x1xf32>
    %cst_30 = arith.constant 3.000000e+01 : f32
    %79 = vector.broadcast %cst_30 : f32 to vector<128x1xf32>
    %80 = arith.mulf %78, %79 : vector<128x1xf32>
    %cst_31 = arith.constant 5.000000e-01 : f32
    %81 = vector.broadcast %cst_31 : f32 to vector<128x1xf32>
    %82 = arith.mulf %81, %74 : vector<128x1xf32>
    %83 = arith.subf %64, %82 : vector<128x1xf32>
    %cst_32 = arith.constant 5.000000e-01 : f32
    %84 = vector.broadcast %cst_32 : f32 to vector<128x1xf32>
    %85 = arith.mulf %84, %80 : vector<128x1xf32>
    %86 = arith.subf %68, %85 : vector<128x1xf32>
    %cst_33 = arith.constant 5.000000e-01 : f32
    %87 = vector.broadcast %cst_33 : f32 to vector<128x1xf32>
    %88 = arith.mulf %87, %74 : vector<128x1xf32>
    %89 = arith.addf %64, %88 : vector<128x1xf32>
    %cst_34 = arith.constant 5.000000e-01 : f32
    %90 = vector.broadcast %cst_34 : f32 to vector<128x1xf32>
    %91 = arith.mulf %90, %80 : vector<128x1xf32>
    %92 = arith.addf %68, %91 : vector<128x1xf32>
    %93 = vector.extract_strided_slice %22 {offsets = [0, 13], sizes = [128, 3], strides = [1, 1]} : vector<128x24xf32> to vector<128x3xf32>
    %94 = vector.extract_strided_slice %22 {offsets = [0, 12], sizes = [128, 1], strides = [1, 1]} : vector<128x24xf32> to vector<128x1xf32>
    %95 = vector.broadcast %94 : vector<128x1xf32> to vector<128x3xf32>
    %96 = arith.mulf %93, %95 : vector<128x3xf32>
    %97 = vector.extract_strided_slice %22 {offsets = [0, 16], sizes = [128, 1], strides = [1, 1]} : vector<128x24xf32> to vector<128x1xf32>
    %cst_35 = arith.constant 1.600000e+01 : f32
    %98 = vector.broadcast %cst_35 : f32 to vector<128x1xf32>
    %99 = arith.mulf %97, %98 : vector<128x1xf32>
    %100 = arith.addf %99, %23 : vector<128x1xf32>
    %101 = vector.extract_strided_slice %22 {offsets = [0, 17], sizes = [128, 1], strides = [1, 1]} : vector<128x24xf32> to vector<128x1xf32>
    %cst_36 = arith.constant 1.600000e+01 : f32
    %102 = vector.broadcast %cst_36 : f32 to vector<128x1xf32>
    %103 = arith.mulf %101, %102 : vector<128x1xf32>
    %104 = arith.addf %103, %24 : vector<128x1xf32>
    %105 = vector.extract_strided_slice %22 {offsets = [0, 18], sizes = [128, 1], strides = [1, 1]} : vector<128x24xf32> to vector<128x1xf32>
    %cst_37 = arith.constant 2.000000e+00 : f32
    %106 = vector.broadcast %cst_37 : f32 to vector<128x1xf32>
    %107 = arith.mulf %105, %106 : vector<128x1xf32>
    %108 = arith.mulf %107, %107 : vector<128x1xf32>
    %cst_38 = arith.constant 3.300000e+01 : f32
    %109 = vector.broadcast %cst_38 : f32 to vector<128x1xf32>
    %110 = arith.mulf %108, %109 : vector<128x1xf32>
    %111 = vector.extract_strided_slice %22 {offsets = [0, 19], sizes = [128, 1], strides = [1, 1]} : vector<128x24xf32> to vector<128x1xf32>
    %cst_39 = arith.constant 2.000000e+00 : f32
    %112 = vector.broadcast %cst_39 : f32 to vector<128x1xf32>
    %113 = arith.mulf %111, %112 : vector<128x1xf32>
    %114 = arith.mulf %113, %113 : vector<128x1xf32>
    %cst_40 = arith.constant 2.300000e+01 : f32
    %115 = vector.broadcast %cst_40 : f32 to vector<128x1xf32>
    %116 = arith.mulf %114, %115 : vector<128x1xf32>
    %cst_41 = arith.constant 5.000000e-01 : f32
    %117 = vector.broadcast %cst_41 : f32 to vector<128x1xf32>
    %118 = arith.mulf %117, %110 : vector<128x1xf32>
    %119 = arith.subf %100, %118 : vector<128x1xf32>
    %cst_42 = arith.constant 5.000000e-01 : f32
    %120 = vector.broadcast %cst_42 : f32 to vector<128x1xf32>
    %121 = arith.mulf %120, %116 : vector<128x1xf32>
    %122 = arith.subf %104, %121 : vector<128x1xf32>
    %cst_43 = arith.constant 5.000000e-01 : f32
    %123 = vector.broadcast %cst_43 : f32 to vector<128x1xf32>
    %124 = arith.mulf %123, %110 : vector<128x1xf32>
    %125 = arith.addf %100, %124 : vector<128x1xf32>
    %cst_44 = arith.constant 5.000000e-01 : f32
    %126 = vector.broadcast %cst_44 : f32 to vector<128x1xf32>
    %127 = arith.mulf %126, %116 : vector<128x1xf32>
    %128 = arith.addf %104, %127 : vector<128x1xf32>
    %129 = vector.extract_strided_slice %22 {offsets = [0, 21], sizes = [128, 3], strides = [1, 1]} : vector<128x24xf32> to vector<128x3xf32>
    %130 = vector.extract_strided_slice %22 {offsets = [0, 20], sizes = [128, 1], strides = [1, 1]} : vector<128x24xf32> to vector<128x1xf32>
    %131 = vector.broadcast %130 : vector<128x1xf32> to vector<128x3xf32>
    %132 = arith.mulf %129, %131 : vector<128x3xf32>
    %133 = tpu.concatenate %47, %50, %53, %56, %83, %86, %89, %92, %119, %122, %125, %128 in 1 : vector<128x1xf32>, vector<128x1xf32>, vector<128x1xf32>, vector<128x1xf32>, vector<128x1xf32>, vector<128x1xf32>, vector<128x1xf32>, vector<128x1xf32>, vector<128x1xf32>, vector<128x1xf32>, vector<128x1xf32>, vector<128x1xf32> -> vector<128x12xf32>
    %c0_45 = arith.constant 0 : index
    %c0_46 = arith.constant 0 : index
    %134 = vector.load %arg7[%c0_45, %c0_46] : memref<128x12xf32, #tpu.memory_space<vmem>>, vector<128x12xf32>
    tpu.vector_store %arg7[%c0_45, %c0_46], %133 {strides = array<i32>} : memref<128x12xf32, #tpu.memory_space<vmem>>, vector<128x12xf32>,
    %135 = tpu.concatenate %60, %96, %132 in 1 : vector<128x3xf32>, vector<128x3xf32>, vector<128x3xf32> -> vector<128x9xf32>
    %c0_47 = arith.constant 0 : index
    %c0_48 = arith.constant 0 : index
    %136 = vector.load %arg8[%c0_47, %c0_48] : memref<128x9xf32, #tpu.memory_space<vmem>>, vector<128x9xf32>
    tpu.vector_store %arg8[%c0_47, %c0_48], %135 {strides = array<i32>} : memref<128x9xf32, #tpu.memory_space<vmem>>, vector<128x9xf32>,
    return
  }
  func.func @transform_0(%arg0: i32) -> (i32, i32) {
    %c0_i32 = arith.constant 0 : i32
    %c0_i32_0 = arith.constant 0 : i32
    return %arg0, %c0_i32 : i32, i32
  }
  func.func @transform_1(%arg0: i32) -> (i32, i32) {
    %c0_i32 = arith.constant 0 : i32
    %c0_i32_0 = arith.constant 0 : i32
    return %arg0, %c0_i32 : i32, i32
  }
  func.func @transform_2(%arg0: i32) -> (i32, i32) {
    %c0_i32 = arith.constant 0 : i32
    %c0_i32_0 = arith.constant 0 : i32
    %c0_i32_1 = arith.constant 0 : i32
    return %c0_i32, %c0_i32_0 : i32, i32
  }
  func.func @transform_3(%arg0: i32) -> (i32, i32) {
    %c0_i32 = arith.constant 0 : i32
    %c0_i32_0 = arith.constant 0 : i32
    %c0_i32_1 = arith.constant 0 : i32
    return %c0_i32, %c0_i32_0 : i32, i32
  }
  func.func @transform_4(%arg0: i32) -> (i32, i32) {
    %c0_i32 = arith.constant 0 : i32
    %c0_i32_0 = arith.constant 0 : i32
    %c0_i32_1 = arith.constant 0 : i32
    return %c0_i32, %c0_i32_0 : i32, i32
  }
  func.func @transform_5(%arg0: i32) -> (i32, i32) {
    %c0_i32 = arith.constant 0 : i32
    %c0_i32_0 = arith.constant 0 : i32
    %c0_i32_1 = arith.constant 0 : i32
    return %c0_i32, %c0_i32_0 : i32, i32
  }
  func.func @transform_6(%arg0: i32) -> (i32, i32) {
    %c0_i32 = arith.constant 0 : i32
    %c0_i32_0 = arith.constant 0 : i32
    return %arg0, %c0_i32 : i32, i32
  }
  func.func @transform_7(%arg0: i32) -> (i32, i32) {
    %c0_i32 = arith.constant 0 : i32
    %c0_i32_0 = arith.constant 0 : i32
    return %arg0, %c0_i32 : i32, i32
  }
}

</mosaic_0001>

<llo_original>
// kernel: tpu_custom_call.1
$region0: #{tpu_custom_call.1}
  #allocation0 [shape = 'u32[]', space=smem, size = 0x4, offset = 0x4, fixed_abs, tag = 'smem constant byte address 0x4 - core index']
  #allocation1 [shape = 'u32[144,128]{1,0:T(1,128)}', space=vmem, size = 0x12000, scoped, tag = 'internal scratch']
  %s0 = inlined_call_operand.vmem [shape: bf16[128,192], index: 0, kind: input, shape index: {}]
  %s1 = inlined_call_operand.vmem [shape: f32[128,2], index: 1, kind: input, shape index: {}]
  %s2 = inlined_call_operand.vmem [shape: bf16[192,32], index: 2, kind: input, shape index: {}]
  %s3 = inlined_call_operand.vmem [shape: f32[1,32], index: 3, kind: input, shape index: {}]
  %s4 = inlined_call_operand.vmem [shape: bf16[32,24], index: 4, kind: input, shape index: {}]
  %s5 = inlined_call_operand.vmem [shape: f32[1,24], index: 5, kind: input, shape index: {}]
  %s6 = inlined_call_operand.vmem [shape: f32[128,12], index: 6, kind: output, shape index: {0}]
  %s7 = inlined_call_operand.vmem [shape: f32[128,9], index: 7, kind: output, shape index: {1}]
  %8 = xla_tuple %s6, %s7
  %s9 = sld [smem:[#allocation0]]
  $region42: #{tpu_custom_call.1} parent=0
    _
  %s11 = ssub.s32 1, %s9
  %s12 = scalar_select 0, %s11, %s9
  // Predicated region
  $region2: #{tpu_custom_call.1} parent=0 // pred_check
    _
  $region3: #{tpu_custom_call.1} parent=0 // pred_check_branch
    %14 = sbr.rel (0) target = $region5
  $region4: #{tpu_custom_call.1} parent=0 // pred_region
    _
  $region5: #{tpu_custom_call.1} parent=0 // pred_fallthru
    _
  // Predicated region
  $region6: #{tpu_custom_call.1} parent=0 // pred_check
    _
  $region7: #{tpu_custom_call.1} parent=0 // pred_check_branch
    %16 = sbr.rel (0) target = $region9
  $region8: #{tpu_custom_call.1} parent=0 // pred_region
    _
  $region9: #{tpu_custom_call.1} parent=0 // pred_fallthru
    _
  // Predicated region
  $region10: #{tpu_custom_call.1} parent=0 // pred_check
    _
  $region11: #{tpu_custom_call.1} parent=0 // pred_check_branch
    %18 = sbr.rel (0) target = $region13
  $region12: #{tpu_custom_call.1} parent=0 // pred_region
    _
  $region13: #{tpu_custom_call.1} parent=0 // pred_fallthru
    _
  // Predicated region
  $region14: #{tpu_custom_call.1} parent=0 // pred_check
    _
  $region15: #{tpu_custom_call.1} parent=0 // pred_check_branch
    %20 = sbr.rel (0) target = $region17
  $region16: #{tpu_custom_call.1} parent=0 // pred_region
    _
  $region17: #{tpu_custom_call.1} parent=0 // pred_fallthru
    _
  // Predicated region
  $region18: #{tpu_custom_call.1} parent=0 // pred_check
    _
  $region19: #{tpu_custom_call.1} parent=0 // pred_check_branch
    %22 = sbr.rel (0) target = $region21
  $region20: #{tpu_custom_call.1} parent=0 // pred_region
    _
  $region21: #{tpu_custom_call.1} parent=0 // pred_fallthru
    _
  // Predicated region
  $region22: #{tpu_custom_call.1} parent=0 // pred_check
    _
  $region23: #{tpu_custom_call.1} parent=0 // pred_check_branch
    %24 = sbr.rel (0) target = $region25
  $region24: #{tpu_custom_call.1} parent=0 // pred_region
    _
  $region25: #{tpu_custom_call.1} parent=0 // pred_fallthru
    _
  %v26 = vld [vmem:[%s0] sm:$0xff]
  %v27 = vld [vmem:[%s0 + $0x8] sm:$0xff]
  %v28 = vld [vmem:[%s0 + $0x10] sm:$0xff]
  %v29 = vld [vmem:[%s0 + $0x18] sm:$0xff]
  %v30 = vld [vmem:[%s0 + $0x20] sm:$0xff]
  %v31 = vld [vmem:[%s0 + $0x28] sm:$0xff]
  %v32 = vld [vmem:[%s0 + $0x30] sm:$0xff]
  %v33 = vld [vmem:[%s0 + $0x38] sm:$0xff]
  %v34 = vld [vmem:[%s0 + $0x40] sm:$0xff]
  %v35 = vld [vmem:[%s0 + $0x48] sm:$0xff]
  %v36 = vld [vmem:[%s0 + $0x50] sm:$0xff]
  %v37 = vld [vmem:[%s0 + $0x58] sm:$0xff]
  %v38 = vld [vmem:[%s0 + $0x60] sm:$0xff]
  %v39 = vld [vmem:[%s0 + $0x68] sm:$0xff]
  %v40 = vld [vmem:[%s0 + $0x70] sm:$0xff]
  %v41 = vld [vmem:[%s0 + $0x78] sm:$0xff]
  %v42 = vld [vmem:[%s2] sm:$0xf]
  %v43 = vld [vmem:[%s2 + $0x4] sm:$0xf]
  %v44 = vld [vmem:[%s2 + $0x8] sm:$0xf]
  %v45 = vld [vmem:[%s2 + $0xc] sm:$0xf]
  %v46 = vld [vmem:[%s2 + $0x10] sm:$0xf]
  %v47 = vld [vmem:[%s2 + $0x14] sm:$0xf]
  %v48 = vld [vmem:[%s2 + $0x18] sm:$0xf]
  %v49 = vld [vmem:[%s2 + $0x1c] sm:$0xf]
  %v50 = vld [vmem:[%s2 + $0x20] sm:$0xf]
  %v51 = vld [vmem:[%s2 + $0x24] sm:$0xf]
  %v52 = vld [vmem:[%s2 + $0x28] sm:$0xf]
  %v53 = vld [vmem:[%s2 + $0x2c] sm:$0xf]
  %v54 = vld [vmem:[%s2 + $0x30] sm:$0xf]
  %v55 = vld [vmem:[%s2 + $0x34] sm:$0xf]
  %v56 = vld [vmem:[%s2 + $0x38] sm:$0xf]
  %v57 = vld [vmem:[%s2 + $0x3c] sm:$0xf]
  %v58 = vld [vmem:[%s2 + $0x40] sm:$0xf]
  %v59 = vld [vmem:[%s2 + $0x44] sm:$0xf]
  %v60 = vld [vmem:[%s2 + $0x48] sm:$0xf]
  %v61 = vld [vmem:[%s2 + $0x4c] sm:$0xf]
  %v62 = vld [vmem:[%s2 + $0x50] sm:$0xf]
  %v63 = vld [vmem:[%s2 + $0x54] sm:$0xf]
  %v64 = vld [vmem:[%s2 + $0x58] sm:$0xf]
  %v65 = vld [vmem:[%s2 + $0x5c] sm:$0xf]
  %v66 = vld [vmem:[%s3] sm:$0x1]
  %v68 = vlaneseq
  %v69 = vshrl.u32 %v68, 7
  %v70 = vsub.s32 0, %v69
  %v71 = vrot.slane %v66, %v70
  %v89 = vunpack.c.l.b16 %v26
  %v90 = vunpack.c.h.b16 %v26
  %v91 = vunpack.c.l.b16 %v27
  %v92 = vunpack.c.h.b16 %v27
  %v93 = vunpack.c.l.b16 %v28
  %v94 = vunpack.c.h.b16 %v28
  %v95 = vunpack.c.l.b16 %v29
  %v96 = vunpack.c.h.b16 %v29
  %v97 = vunpack.c.l.b16 %v30
  %v98 = vunpack.c.h.b16 %v30
  %v99 = vunpack.c.l.b16 %v31
  %v100 = vunpack.c.h.b16 %v31
  %v101 = vunpack.c.l.b16 %v32
  %v102 = vunpack.c.h.b16 %v32
  %v103 = vunpack.c.l.b16 %v33
  %v104 = vunpack.c.h.b16 %v33
  %v105 = vunpack.c.l.b16 %v34
  %v106 = vunpack.c.h.b16 %v34
  %v107 = vunpack.c.l.b16 %v35
  %v108 = vunpack.c.h.b16 %v35
  %v109 = vunpack.c.l.b16 %v36
  %v110 = vunpack.c.h.b16 %v36
  %v111 = vunpack.c.l.b16 %v37
  %v112 = vunpack.c.h.b16 %v37
  %v113 = vunpack.c.l.b16 %v38
  %v114 = vunpack.c.h.b16 %v38
  %v115 = vunpack.c.l.b16 %v39
  %v116 = vunpack.c.h.b16 %v39
  %v117 = vunpack.c.l.b16 %v40
  %v118 = vunpack.c.h.b16 %v40
  %v119 = vunpack.c.l.b16 %v41
  %v120 = vunpack.c.h.b16 %v41
  %v121 = vpack.c.b16 %v91, %v89
  %v122 = vpack.c.b16 %v92, %v90
  %v123 = vpack.c.b16 %v95, %v93
  %v124 = vpack.c.b16 %v96, %v94
  %v125 = vpack.c.b16 %v99, %v97
  %v126 = vpack.c.b16 %v100, %v98
  %v127 = vpack.c.b16 %v103, %v101
  %v128 = vpack.c.b16 %v104, %v102
  %v129 = vpack.c.b16 %v107, %v105
  %v130 = vpack.c.b16 %v108, %v106
  %v131 = vpack.c.b16 %v111, %v109
  %v132 = vpack.c.b16 %v112, %v110
  %v133 = vpack.c.b16 %v115, %v113
  %v134 = vpack.c.b16 %v116, %v114
  %v135 = vpack.c.b16 %v119, %v117
  %v136 = vpack.c.b16 %v120, %v118
  %v169 = vunpack.c.l.b16 %v42
  %v170 = vunpack.c.l.b16 %v43
  %v171 = vunpack.c.l.b16 %v44
  %v172 = vunpack.c.l.b16 %v45
  %v173 = vunpack.c.l.b16 %v46
  %v174 = vunpack.c.l.b16 %v47
  %v175 = vunpack.c.l.b16 %v48
  %v176 = vunpack.c.l.b16 %v49
  %v177 = vunpack.c.l.b16 %v50
  %v178 = vunpack.c.l.b16 %v51
  %v179 = vunpack.c.l.b16 %v52
  %v180 = vunpack.c.l.b16 %v53
  %v181 = vunpack.c.l.b16 %v54
  %v182 = vunpack.c.l.b16 %v55
  %v183 = vunpack.c.l.b16 %v56
  %v184 = vunpack.c.l.b16 %v57
  %v185 = vunpack.c.l.b16 %v58
  %v186 = vunpack.c.l.b16 %v59
  %v187 = vunpack.c.l.b16 %v60
  %v188 = vunpack.c.l.b16 %v61
  %v189 = vunpack.c.l.b16 %v62
  %v190 = vunpack.c.l.b16 %v63
  %v191 = vunpack.c.l.b16 %v64
  %v192 = vunpack.c.l.b16 %v65
  %v193 = vpack.c.b16 %v170, %v169
  %v194 = vpack.c.b16 %v172, %v171
  %v195 = vpack.c.b16 %v174, %v173
  %v196 = vpack.c.b16 %v176, %v175
  %v197 = vpack.c.b16 %v178, %v177
  %v198 = vpack.c.b16 %v180, %v179
  %v199 = vpack.c.b16 %v182, %v181
  %v200 = vpack.c.b16 %v184, %v183
  %v201 = vpack.c.b16 %v186, %v185
  %v202 = vpack.c.b16 %v188, %v187
  %v203 = vpack.c.b16 %v190, %v189
  %v204 = vpack.c.b16 %v192, %v191
  %vm217 = vcmask 523264
  %v219 = vsel %vm217, %v122, 0
  %v222 = vsel %vm217, %v124, 0
  %v225 = vsel %vm217, %v126, 0
  %v228 = vsel %vm217, %v128, 0
  %v231 = vsel %vm217, %v130, 0
  %v234 = vsel %vm217, %v132, 0
  %v237 = vsel %vm217, %v134, 0
  %v240 = vsel %vm217, %v136, 0
  %242 = vmatprep.subr.bf16.mxu0 0
  %243 = vmatpush1.bf16.msra.mxu0 %v193
  %244 = vmatprep.subr.bf16.mxu0 0
  %245 = vmatpush1.bf16.msra.mxu0 %v194
  %246 = vmatprep.subr.bf16.mxu0 0
  %247 = vmatpush1.bf16.msra.mxu0 %v195
  %248 = vmatprep.subr.bf16.mxu0 0
  %249 = vmatpush1.bf16.msra.mxu0 %v196
  %250 = vmatprep.subr.bf16.mxu0 0
  %251 = vmatpush1.bf16.msra.mxu0 %v197
  %252 = vmatprep.subr.bf16.mxu0 0
  %253 = vmatpush1.bf16.msra.mxu0 %v198
  %254 = vmatprep.subr.bf16.mxu0 0
  %255 = vmatpush1.bf16.msra.mxu0 %v199
  %256 = vmatprep.subr.bf16.mxu0 0
  %257 = vmatpush1.bf16.msra.mxu0 %v200
  %258 = vmatprep.subr.bf16.mxu0 0
  %259 = vmatpush1.bf16.msra.mxu0 %v201
  %260 = vmatprep.subr.bf16.mxu0 0
  %261 = vmatpush1.bf16.msra.mxu0 %v202
  %262 = vmatprep.subr.bf16.mxu0 0
  %263 = vmatpush1.bf16.msra.mxu0 %v203
  %264 = vmatprep.subr.bf16.mxu0 0
  %265 = vmatpush1.bf16.msra.mxu0 %v204
  %266 = vmatprep.subr.bf16.mxu0 0
  %267 = vmatpush1.bf16.msra.mxu0 0
  %268 = vmatprep.subr.bf16.mxu0 0
  %269 = vmatpush1.bf16.msra.mxu0 0
  %270 = vmatprep.subr.bf16.mxu0 0
  %271 = vmatpush1.bf16.msra.mxu0 0
  %272 = vmatprep.subr.bf16.mxu0 0
  %273 = vmatpush1.bf16.msra.mxu0 0
  %274 = vmatprep.mubr.bf16.mxu0 %v219
  %275 = vmatmul.mubr.bf16.gmra.mrb[0].mxu0 %v121
  %v276 = vpop.f32.mrb[0].mxu0
  %v277 = vadd.f32 %v71, %v276
  %v278 = vpop.f32.mrb[0].mxu0
  %v279 = vpop.f32.mrb[0].mxu0
  %v280 = vadd.f32 %v71, %v279
  %v281 = vpop.f32.mrb[0].mxu0
  %282 = vmatprep.mubr.bf16.mxu0 %v222
  %283 = vmatmul.mubr.bf16.gmra.mrb[0].mxu0 %v123
  %v284 = vpop.f32.mrb[0].mxu0
  %v285 = vadd.f32 %v71, %v284
  %v286 = vpop.f32.mrb[0].mxu0
  %v287 = vpop.f32.mrb[0].mxu0
  %v288 = vadd.f32 %v71, %v287
  %v289 = vpop.f32.mrb[0].mxu0
  %290 = vmatprep.mubr.bf16.mxu0 %v225
  %291 = vmatmul.mubr.bf16.gmra.mrb[0].mxu0 %v125
  %v292 = vpop.f32.mrb[0].mxu0
  %v293 = vadd.f32 %v71, %v292
  %v294 = vpop.f32.mrb[0].mxu0
  %v295 = vpop.f32.mrb[0].mxu0
  %v296 = vadd.f32 %v71, %v295
  %v297 = vpop.f32.mrb[0].mxu0
  %298 = vmatprep.mubr.bf16.mxu0 %v228
  %299 = vmatmul.mubr.bf16.gmra.mrb[0].mxu0 %v127
  %v300 = vpop.f32.mrb[0].mxu0
  %v301 = vadd.f32 %v71, %v300
  %v302 = vpop.f32.mrb[0].mxu0
  %v303 = vpop.f32.mrb[0].mxu0
  %v304 = vadd.f32 %v71, %v303
  %v305 = vpop.f32.mrb[0].mxu0
  %306 = vmatprep.mubr.bf16.mxu0 %v231
  %307 = vmatmul.mubr.bf16.gmra.mrb[0].mxu0 %v129
  %v308 = vpop.f32.mrb[0].mxu0
  %v309 = vadd.f32 %v71, %v308
  %v310 = vpop.f32.mrb[0].mxu0
  %v311 = vpop.f32.mrb[0].mxu0
  %v312 = vadd.f32 %v71, %v311
  %v313 = vpop.f32.mrb[0].mxu0
  %314 = vmatprep.mubr.bf16.mxu0 %v234
  %315 = vmatmul.mubr.bf16.gmra.mrb[0].mxu0 %v131
  %v316 = vpop.f32.mrb[0].mxu0
  %v317 = vadd.f32 %v71, %v316
  %v318 = vpop.f32.mrb[0].mxu0
  %v319 = vpop.f32.mrb[0].mxu0
  %v320 = vadd.f32 %v71, %v319
  %v321 = vpop.f32.mrb[0].mxu0
  %322 = vmatprep.mubr.bf16.mxu0 %v237
  %323 = vmatmul.mubr.bf16.gmra.mrb[0].mxu0 %v133
  %v324 = vpop.f32.mrb[0].mxu0
  %v325 = vadd.f32 %v71, %v324
  %v326 = vpop.f32.mrb[0].mxu0
  %v327 = vpop.f32.mrb[0].mxu0
  %v328 = vadd.f32 %v71, %v327
  %v329 = vpop.f32.mrb[0].mxu0
  %330 = vmatprep.mubr.bf16.mxu0 %v240
  %331 = vmatmul.mubr.bf16.gmra.mrb[0].mxu0 %v135
  %v332 = vpop.f32.mrb[0].mxu0
  %v333 = vadd.f32 %v71, %v332
  %v334 = vpop.f32.mrb[0].mxu0
  %v335 = vpop.f32.mrb[0].mxu0
  %v336 = vadd.f32 %v71, %v335
  %v337 = vpop.f32.mrb[0].mxu0
  %338 = vdwg.mxu0
  %v339 = vxor.u32 %v277, 2147483648
  %v340 = vxor.u32 %v280, 2147483648
  %v341 = vxor.u32 %v285, 2147483648
  %v342 = vxor.u32 %v288, 2147483648
  %v343 = vxor.u32 %v293, 2147483648
  %v344 = vxor.u32 %v296, 2147483648
  %v345 = vxor.u32 %v301, 2147483648
  %v346 = vxor.u32 %v304, 2147483648
  %v347 = vxor.u32 %v309, 2147483648
  %v348 = vxor.u32 %v312, 2147483648
  %v349 = vxor.u32 %v317, 2147483648
  %v350 = vxor.u32 %v320, 2147483648
  %v351 = vxor.u32 %v325, 2147483648
  %v352 = vxor.u32 %v328, 2147483648
  %v353 = vxor.u32 %v333, 2147483648
  %v354 = vxor.u32 %v336, 2147483648
  %v355 = vmul.f32 %v339, 1.442695
  %v356 = vpow.pop %v355
  %v357 = vmul.f32 %v340, 1.442695
  %v358 = vpow.pop %v357
  %v359 = vmul.f32 %v341, 1.442695
  %v360 = vpow.pop %v359
  %v361 = vmul.f32 %v342, 1.442695
  %v362 = vpow.pop %v361
  %v363 = vmul.f32 %v343, 1.442695
  %v364 = vpow.pop %v363
  %v365 = vmul.f32 %v344, 1.442695
  %v366 = vpow.pop %v365
  %v367 = vmul.f32 %v345, 1.442695
  %v368 = vpow.pop %v367
  %v369 = vmul.f32 %v346, 1.442695
  %v370 = vpow.pop %v369
  %v371 = vmul.f32 %v347, 1.442695
  %v372 = vpow.pop %v371
  %v373 = vmul.f32 %v348, 1.442695
  %v374 = vpow.pop %v373
  %v375 = vmul.f32 %v349, 1.442695
  %v376 = vpow.pop %v375
  %v377 = vmul.f32 %v350, 1.442695
  %v378 = vpow.pop %v377
  %v379 = vmul.f32 %v351, 1.442695
  %v380 = vpow.pop %v379
  %v381 = vmul.f32 %v352, 1.442695
  %v382 = vpow.pop %v381
  %v383 = vmul.f32 %v353, 1.442695
  %v384 = vpow.pop %v383
  %v385 = vmul.f32 %v354, 1.442695
  %v386 = vpow.pop %v385
  %v387 = vadd.f32 %v356, 1.0
  %v388 = vadd.f32 %v358, 1.0
  %v389 = vadd.f32 %v360, 1.0
  %v390 = vadd.f32 %v362, 1.0
  %v391 = vadd.f32 %v364, 1.0
  %v392 = vadd.f32 %v366, 1.0
  %v393 = vadd.f32 %v368, 1.0
  %v394 = vadd.f32 %v370, 1.0
  %v395 = vadd.f32 %v372, 1.0
  %v396 = vadd.f32 %v374, 1.0
  %v397 = vadd.f32 %v376, 1.0
  %v398 = vadd.f32 %v378, 1.0
  %v399 = vadd.f32 %v380, 1.0
  %v400 = vadd.f32 %v382, 1.0
  %v401 = vadd.f32 %v384, 1.0
  %v402 = vadd.f32 %v386, 1.0
  %v403 = vrcp.pop %v387
  %v404 = vmul.f32 1.0, %v403
  %v405 = vrcp.pop %v388
  %v406 = vmul.f32 1.0, %v405
  %v407 = vrcp.pop %v389
  %v408 = vmul.f32 1.0, %v407
  %v409 = vrcp.pop %v390
  %v410 = vmul.f32 1.0, %v409
  %v411 = vrcp.pop %v391
  %v412 = vmul.f32 1.0, %v411
  %v413 = vrcp.pop %v392
  %v414 = vmul.f32 1.0, %v413
  %v415 = vrcp.pop %v393
  %v416 = vmul.f32 1.0, %v415
  %v417 = vrcp.pop %v394
  %v418 = vmul.f32 1.0, %v417
  %v419 = vrcp.pop %v395
  %v420 = vmul.f32 1.0, %v419
  %v421 = vrcp.pop %v396
  %v422 = vmul.f32 1.0, %v421
  %v423 = vrcp.pop %v397
  %v424 = vmul.f32 1.0, %v423
  %v425 = vrcp.pop %v398
  %v426 = vmul.f32 1.0, %v425
  %v427 = vrcp.pop %v399
  %v428 = vmul.f32 1.0, %v427
  %v429 = vrcp.pop %v400
  %v430 = vmul.f32 1.0, %v429
  %v431 = vrcp.pop %v401
  %v432 = vmul.f32 1.0, %v431
  %v433 = vrcp.pop %v402
  %v434 = vmul.f32 1.0, %v433
  %v435 = vmul.f32 %v277, %v404
  %v436 = vmul.f32 %v280, %v406
  %v437 = vmul.f32 %v285, %v408
  %v438 = vmul.f32 %v288, %v410
  %v439 = vmul.f32 %v293, %v412
  %v440 = vmul.f32 %v296, %v414
  %v441 = vmul.f32 %v301, %v416
  %v442 = vmul.f32 %v304, %v418
  %v443 = vmul.f32 %v309, %v420
  %v444 = vmul.f32 %v312, %v422
  %v445 = vmul.f32 %v317, %v424
  %v446 = vmul.f32 %v320, %v426
  %v447 = vmul.f32 %v325, %v428
  %v448 = vmul.f32 %v328, %v430
  %v449 = vmul.f32 %v333, %v432
  %v450 = vmul.f32 %v336, %v434
  %v451 = vpack.c.bf16 %v436, %v435
  %v452 = vpack.c.bf16 %v438, %v437
  %v453 = vpack.c.bf16 %v440, %v439
  %v454 = vpack.c.bf16 %v442, %v441
  %v455 = vpack.c.bf16 %v444, %v443
  %v456 = vpack.c.bf16 %v446, %v445
  %v457 = vpack.c.bf16 %v448, %v447
  %v458 = vpack.c.bf16 %v450, %v449
  %v459 = vld [vmem:[%s4] sm:$0xf]
  %v460 = vld [vmem:[%s4 + $0x4] sm:$0xf]
  %v461 = vld [vmem:[%s4 + $0x8] sm:$0xf]
  %v462 = vld [vmem:[%s4 + $0xc] sm:$0xf]
  %v463 = vld [vmem:[%s5] sm:$0x1]
  %v465 = vlaneseq
  %v466 = vshrl.u32 %v465, 7
  %v467 = vsub.s32 0, %v466
  %v468 = vrot.slane %v463, %v467
  %v474 = vunpack.c.l.b16 %v459
  %v475 = vunpack.c.l.b16 %v460
  %v476 = vunpack.c.l.b16 %v461
  %v477 = vunpack.c.l.b16 %v462
  %v478 = vpack.c.b16 %v475, %v474
  %v479 = vpack.c.b16 %v477, %v476
  %vm482 = vcmask 261120
  %v484 = vsel %vm482, %v451, 0
  %v487 = vsel %vm482, %v452, 0
  %v490 = vsel %vm482, %v453, 0
  %v493 = vsel %vm482, %v454, 0
  %v496 = vsel %vm482, %v455, 0
  %v499 = vsel %vm482, %v456, 0
  %v502 = vsel %vm482, %v457, 0
  %v505 = vsel %vm482, %v458, 0
  %507 = vmatprep.subr.bf16.mxu0 0
  %508 = vmatpush1.bf16.msra.mxu0 %v478
  %509 = vmatprep.subr.bf16.mxu0 0
  %510 = vmatpush1.bf16.msra.mxu0 %v479
  %511 = vmatprep.subr.bf16.mxu0 0
  %512 = vmatpush1.bf16.msra.mxu0 0
  %513 = vmatprep.subr.bf16.mxu0 0
  %514 = vmatpush1.bf16.msra.mxu0 0
  %515 = vmatprep.subr.bf16.mxu0 0
  %516 = vmatpush1.bf16.msra.mxu0 0
  %517 = vmatprep.subr.bf16.mxu0 0
  %518 = vmatpush1.bf16.msra.mxu0 0
  %519 = vmatprep.subr.bf16.mxu0 0
  %520 = vmatpush1.bf16.msra.mxu0 0
  %521 = vmatprep.subr.bf16.mxu0 0
  %522 = vmatpush1.bf16.msra.mxu0 0
  %523 = vmatprep.subr.bf16.mxu0 0
  %524 = vmatpush1.bf16.msra.mxu0 0
  %525 = vmatprep.subr.bf16.mxu0 0
  %526 = vmatpush1.bf16.msra.mxu0 0
  %527 = vmatprep.subr.bf16.mxu0 0
  %528 = vmatpush1.bf16.msra.mxu0 0
  %529 = vmatprep.subr.bf16.mxu0 0
  %530 = vmatpush1.bf16.msra.mxu0 0
  %531 = vmatprep.subr.bf16.mxu0 0
  %532 = vmatpush1.bf16.msra.mxu0 0
  %533 = vmatprep.subr.bf16.mxu0 0
  %534 = vmatpush1.bf16.msra.mxu0 0
  %535 = vmatprep.subr.bf16.mxu0 0
  %536 = vmatpush1.bf16.msra.mxu0 0
  %537 = vmatprep.subr.bf16.mxu0 0
  %538 = vmatpush1.bf16.msra.mxu0 0
  %539 = vmatprep.mubr.bf16.mxu0 0
  %540 = vmatmul.mubr.bf16.gmra.mrb[0].mxu0 %v484
  %v541 = vpop.f32.mrb[0].mxu0
  %v542 = vadd.f32 %v468, %v541
  %v543 = vpop.f32.mrb[0].mxu0
  %v544 = vpop.f32.mrb[0].mxu0
  %v545 = vadd.f32 %v468, %v544
  %v546 = vpop.f32.mrb[0].mxu0
  %547 = vmatprep.mubr.bf16.mxu0 0
  %548 = vmatmul.mubr.bf16.gmra.mrb[0].mxu0 %v487
  %v549 = vpop.f32.mrb[0].mxu0
  %v550 = vadd.f32 %v468, %v549
  %v551 = vpop.f32.mrb[0].mxu0
  %v552 = vpop.f32.mrb[0].mxu0
  %v553 = vadd.f32 %v468, %v552
  %v554 = vpop.f32.mrb[0].mxu0
  %555 = vmatprep.mubr.bf16.mxu0 0
  %556 = vmatmul.mubr.bf16.gmra.mrb[0].mxu0 %v490
  %v557 = vpop.f32.mrb[0].mxu0
  %v558 = vadd.f32 %v468, %v557
  %v559 = vpop.f32.mrb[0].mxu0
  %v560 = vpop.f32.mrb[0].mxu0
  %v561 = vadd.f32 %v468, %v560
  %v562 = vpop.f32.mrb[0].mxu0
  %563 = vmatprep.mubr.bf16.mxu0 0
  %564 = vmatmul.mubr.bf16.gmra.mrb[0].mxu0 %v493
  %v565 = vpop.f32.mrb[0].mxu0
  %v566 = vadd.f32 %v468, %v565
  %v567 = vpop.f32.mrb[0].mxu0
  %v568 = vpop.f32.mrb[0].mxu0
  %v569 = vadd.f32 %v468, %v568
  %v570 = vpop.f32.mrb[0].mxu0
  %571 = vmatprep.mubr.bf16.mxu0 0
  %572 = vmatmul.mubr.bf16.gmra.mrb[0].mxu0 %v496
  %v573 = vpop.f32.mrb[0].mxu0
  %v574 = vadd.f32 %v468, %v573
  %v575 = vpop.f32.mrb[0].mxu0
  %v576 = vpop.f32.mrb[0].mxu0
  %v577 = vadd.f32 %v468, %v576
  %v578 = vpop.f32.mrb[0].mxu0
  %579 = vmatprep.mubr.bf16.mxu0 0
  %580 = vmatmul.mubr.bf16.gmra.mrb[0].mxu0 %v499
  %v581 = vpop.f32.mrb[0].mxu0
  %v582 = vadd.f32 %v468, %v581
  %v583 = vpop.f32.mrb[0].mxu0
  %v584 = vpop.f32.mrb[0].mxu0
  %v585 = vadd.f32 %v468, %v584
  %v586 = vpop.f32.mrb[0].mxu0
  %587 = vmatprep.mubr.bf16.mxu0 0
  %588 = vmatmul.mubr.bf16.gmra.mrb[0].mxu0 %v502
  %v589 = vpop.f32.mrb[0].mxu0
  %v590 = vadd.f32 %v468, %v589
  %v591 = vpop.f32.mrb[0].mxu0
  %v592 = vpop.f32.mrb[0].mxu0
  %v593 = vadd.f32 %v468, %v592
  %v594 = vpop.f32.mrb[0].mxu0
  %595 = vmatprep.mubr.bf16.mxu0 0
  %596 = vmatmul.mubr.bf16.gmra.mrb[0].mxu0 %v505
  %v597 = vpop.f32.mrb[0].mxu0
  %v598 = vadd.f32 %v468, %v597
  %v599 = vpop.f32.mrb[0].mxu0
  %v600 = vpop.f32.mrb[0].mxu0
  %v601 = vadd.f32 %v468, %v600
  %v602 = vpop.f32.mrb[0].mxu0
  %603 = vdwg.mxu0
  %v604 = vxor.u32 %v542, 2147483648
  %v605 = vxor.u32 %v545, 2147483648
  %v606 = vxor.u32 %v550, 2147483648
  %v607 = vxor.u32 %v553, 2147483648
  %v608 = vxor.u32 %v558, 2147483648
  %v609 = vxor.u32 %v561, 2147483648
  %v610 = vxor.u32 %v566, 2147483648
  %v611 = vxor.u32 %v569, 2147483648
  %v612 = vxor.u32 %v574, 2147483648
  %v613 = vxor.u32 %v577, 2147483648
  %v614 = vxor.u32 %v582, 2147483648
  %v615 = vxor.u32 %v585, 2147483648
  %v616 = vxor.u32 %v590, 2147483648
  %v617 = vxor.u32 %v593, 2147483648
  %v618 = vxor.u32 %v598, 2147483648
  %v619 = vxor.u32 %v601, 2147483648
  %v620 = vmul.f32 %v604, 1.442695
  %v621 = vpow.pop %v620
  %v622 = vmul.f32 %v605, 1.442695
  %v623 = vpow.pop %v622
  %v624 = vmul.f32 %v606, 1.442695
  %v625 = vpow.pop %v624
  %v626 = vmul.f32 %v607, 1.442695
  %v627 = vpow.pop %v626
  %v628 = vmul.f32 %v608, 1.442695
  %v629 = vpow.pop %v628
  %v630 = vmul.f32 %v609, 1.442695
  %v631 = vpow.pop %v630
  %v632 = vmul.f32 %v610, 1.442695
  %v633 = vpow.pop %v632
  %v634 = vmul.f32 %v611, 1.442695
  %v635 = vpow.pop %v634
  %v636 = vmul.f32 %v612, 1.442695
  %v637 = vpow.pop %v636
  %v638 = vmul.f32 %v613, 1.442695
  %v639 = vpow.pop %v638
  %v640 = vmul.f32 %v614, 1.442695
  %v641 = vpow.pop %v640
  %v642 = vmul.f32 %v615, 1.442695
  %v643 = vpow.pop %v642
  %v644 = vmul.f32 %v616, 1.442695
  %v645 = vpow.pop %v644
  %v646 = vmul.f32 %v617, 1.442695
  %v647 = vpow.pop %v646
  %v648 = vmul.f32 %v618, 1.442695
  %v649 = vpow.pop %v648
  %v650 = vmul.f32 %v619, 1.442695
  %v651 = vpow.pop %v650
  %v652 = vadd.f32 %v621, 1.0
  %v653 = vadd.f32 %v623, 1.0
  %v654 = vadd.f32 %v625, 1.0
  %v655 = vadd.f32 %v627, 1.0
  %v656 = vadd.f32 %v629, 1.0
  %v657 = vadd.f32 %v631, 1.0
  %v658 = vadd.f32 %v633, 1.0
  %v659 = vadd.f32 %v635, 1.0
  %v660 = vadd.f32 %v637, 1.0
  %v661 = vadd.f32 %v639, 1.0
  %v662 = vadd.f32 %v641, 1.0
  %v663 = vadd.f32 %v643, 1.0
  %v664 = vadd.f32 %v645, 1.0
  %v665 = vadd.f32 %v647, 1.0
  %v666 = vadd.f32 %v649, 1.0
  %v667 = vadd.f32 %v651, 1.0
  %v668 = vrcp.pop %v652
  %v669 = vmul.f32 1.0, %v668
  %v670 = vrcp.pop %v653
  %v671 = vmul.f32 1.0, %v670
  %v672 = vrcp.pop %v654
  %v673 = vmul.f32 1.0, %v672
  %v674 = vrcp.pop %v655
  %v675 = vmul.f32 1.0, %v674
  %v676 = vrcp.pop %v656
  %v677 = vmul.f32 1.0, %v676
  %v678 = vrcp.pop %v657
  %v679 = vmul.f32 1.0, %v678
  %v680 = vrcp.pop %v658
  %v681 = vmul.f32 1.0, %v680
  %v682 = vrcp.pop %v659
  %v683 = vmul.f32 1.0, %v682
  %v684 = vrcp.pop %v660
  %v685 = vmul.f32 1.0, %v684
  %v686 = vrcp.pop %v661
  %v687 = vmul.f32 1.0, %v686
  %v688 = vrcp.pop %v662
  %v689 = vmul.f32 1.0, %v688
  %v690 = vrcp.pop %v663
  %v691 = vmul.f32 1.0, %v690
  %v692 = vrcp.pop %v664
  %v693 = vmul.f32 1.0, %v692
  %v694 = vrcp.pop %v665
  %v695 = vmul.f32 1.0, %v694
  %v696 = vrcp.pop %v666
  %v697 = vmul.f32 1.0, %v696
  %v698 = vrcp.pop %v667
  %v699 = vmul.f32 1.0, %v698
  %v700 = vld [vmem:[%s1] sm:$0xff]
  %v701 = vld [vmem:[%s1 + $0x8] sm:$0xff]
  %v702 = vld [vmem:[%s1 + $0x10] sm:$0xff]
  %v703 = vld [vmem:[%s1 + $0x18] sm:$0xff]
  %v704 = vld [vmem:[%s1 + $0x20] sm:$0xff]
  %v705 = vld [vmem:[%s1 + $0x28] sm:$0xff]
  %v706 = vld [vmem:[%s1 + $0x30] sm:$0xff]
  %v707 = vld [vmem:[%s1 + $0x38] sm:$0xff]
  %v708 = vld [vmem:[%s1 + $0x40] sm:$0xff]
  %v709 = vld [vmem:[%s1 + $0x48] sm:$0xff]
  %v710 = vld [vmem:[%s1 + $0x50] sm:$0xff]
  %v711 = vld [vmem:[%s1 + $0x58] sm:$0xff]
  %v712 = vld [vmem:[%s1 + $0x60] sm:$0xff]
  %v713 = vld [vmem:[%s1 + $0x68] sm:$0xff]
  %v714 = vld [vmem:[%s1 + $0x70] sm:$0xff]
  %v715 = vld [vmem:[%s1 + $0x78] sm:$0xff]
  %v716 = vmul.f32 %v669, 16.0
  %v717 = vmul.f32 %v671, 16.0
  %v718 = vmul.f32 %v673, 16.0
  %v719 = vmul.f32 %v675, 16.0
  %v720 = vmul.f32 %v677, 16.0
  %v721 = vmul.f32 %v679, 16.0
  %v722 = vmul.f32 %v681, 16.0
  %v723 = vmul.f32 %v683, 16.0
  %v724 = vmul.f32 %v685, 16.0
  %v725 = vmul.f32 %v687, 16.0
  %v726 = vmul.f32 %v689, 16.0
  %v727 = vmul.f32 %v691, 16.0
  %v728 = vmul.f32 %v693, 16.0
  %v729 = vmul.f32 %v695, 16.0
  %v730 = vmul.f32 %v697, 16.0
  %v731 = vmul.f32 %v699, 16.0
  %v732 = vadd.f32 %v716, %v700
  %v733 = vadd.f32 %v717, %v701
  %v734 = vadd.f32 %v718, %v702
  %v735 = vadd.f32 %v719, %v703
  %v736 = vadd.f32 %v720, %v704
  %v737 = vadd.f32 %v721, %v705
  %v738 = vadd.f32 %v722, %v706
  %v739 = vadd.f32 %v723, %v707
  %v740 = vadd.f32 %v724, %v708
  %v741 = vadd.f32 %v725, %v709
  %v742 = vadd.f32 %v726, %v710
  %v743 = vadd.f32 %v727, %v711
  %v744 = vadd.f32 %v728, %v712
  %v745 = vadd.f32 %v729, %v713
  %v746 = vadd.f32 %v730, %v714
  %v747 = vadd.f32 %v731, %v715
  %v748 = vmul.f32 %v669, 2.0
  %v749 = vmul.f32 %v671, 2.0
  %v750 = vmul.f32 %v673, 2.0
  %v751 = vmul.f32 %v675, 2.0
  %v752 = vmul.f32 %v677, 2.0
  %v753 = vmul.f32 %v679, 2.0
  %v754 = vmul.f32 %v681, 2.0
  %v755 = vmul.f32 %v683, 2.0
  %v756 = vmul.f32 %v685, 2.0
  %v757 = vmul.f32 %v687, 2.0
  %v758 = vmul.f32 %v689, 2.0
  %v759 = vmul.f32 %v691, 2.0
  %v760 = vmul.f32 %v693, 2.0
  %v761 = vmul.f32 %v695, 2.0
  %v762 = vmul.f32 %v697, 2.0
  %v763 = vmul.f32 %v699, 2.0
  %v764 = vmul.f32 %v748, %v748
  %v765 = vmul.f32 %v749, %v749
  %v766 = vmul.f32 %v750, %v750
  %v767 = vmul.f32 %v751, %v751
  %v768 = vmul.f32 %v752, %v752
  %v769 = vmul.f32 %v753, %v753
  %v770 = vmul.f32 %v754, %v754
  %v771 = vmul.f32 %v755, %v755
  %v772 = vmul.f32 %v756, %v756
  %v773 = vmul.f32 %v757, %v757
  %v774 = vmul.f32 %v758, %v758
  %v775 = vmul.f32 %v759, %v759
  %v776 = vmul.f32 %v760, %v760
  %v777 = vmul.f32 %v761, %v761
  %v778 = vmul.f32 %v762, %v762
  %v779 = vmul.f32 %v763, %v763
  %v780 = vmul.f32 %v764, 10.0
  %v781 = vmul.f32 %v765, 10.0
  %v782 = vmul.f32 %v766, 10.0
  %v783 = vmul.f32 %v767, 10.0
  %v784 = vmul.f32 %v768, 10.0
  %v785 = vmul.f32 %v769, 10.0
  %v786 = vmul.f32 %v770, 10.0
  %v787 = vmul.f32 %v771, 10.0
  %v788 = vmul.f32 %v772, 10.0
  %v789 = vmul.f32 %v773, 10.0
  %v790 = vmul.f32 %v774, 10.0
  %v791 = vmul.f32 %v775, 10.0
  %v792 = vmul.f32 %v776, 10.0
  %v793 = vmul.f32 %v777, 10.0
  %v794 = vmul.f32 %v778, 10.0
  %v795 = vmul.f32 %v779, 10.0
  %v796 = vmul.f32 %v764, 13.0
  %v797 = vmul.f32 %v765, 13.0
  %v798 = vmul.f32 %v766, 13.0
  %v799 = vmul.f32 %v767, 13.0
  %v800 = vmul.f32 %v768, 13.0
  %v801 = vmul.f32 %v769, 13.0
  %v802 = vmul.f32 %v770, 13.0
  %v803 = vmul.f32 %v771, 13.0
  %v804 = vmul.f32 %v772, 13.0
  %v805 = vmul.f32 %v773, 13.0
  %v806 = vmul.f32 %v774, 13.0
  %v807 = vmul.f32 %v775, 13.0
  %v808 = vmul.f32 %v776, 13.0
  %v809 = vmul.f32 %v777, 13.0
  %v810 = vmul.f32 %v778, 13.0
  %v811 = vmul.f32 %v779, 13.0
  %v812 = vmul.f32 %v780, 0.5
  %v813 = vmul.f32 %v781, 0.5
  %v814 = vmul.f32 %v782, 0.5
  %v815 = vmul.f32 %v783, 0.5
  %v816 = vmul.f32 %v784, 0.5
  %v817 = vmul.f32 %v785, 0.5
  %v818 = vmul.f32 %v786, 0.5
  %v819 = vmul.f32 %v787, 0.5
  %v820 = vmul.f32 %v788, 0.5
  %v821 = vmul.f32 %v789, 0.5
  %v822 = vmul.f32 %v790, 0.5
  %v823 = vmul.f32 %v791, 0.5
  %v824 = vmul.f32 %v792, 0.5
  %v825 = vmul.f32 %v793, 0.5
  %v826 = vmul.f32 %v794, 0.5
  %v827 = vmul.f32 %v795, 0.5
  %844 = vrot.lane.b32.xlu0 %v812, 126
  %v845 = vpop.permute.xlu0 %844
  %846 = vrot.lane.b32.xlu0 %v813, 126
  %v847 = vpop.permute.xlu0 %846
  %848 = vrot.lane.b32.xlu0 %v814, 126
  %v849 = vpop.permute.xlu0 %848
  %850 = vrot.lane.b32.xlu0 %v815, 126
  %v851 = vpop.permute.xlu0 %850
  %852 = vrot.lane.b32.xlu0 %v816, 126
  %v853 = vpop.permute.xlu0 %852
  %854 = vrot.lane.b32.xlu0 %v817, 126
  %v855 = vpop.permute.xlu0 %854
  %856 = vrot.lane.b32.xlu0 %v818, 126
  %v857 = vpop.permute.xlu0 %856
  %858 = vrot.lane.b32.xlu0 %v819, 126
  %v859 = vpop.permute.xlu0 %858
  %860 = vrot.lane.b32.xlu0 %v820, 126
  %v861 = vpop.permute.xlu0 %860
  %862 = vrot.lane.b32.xlu0 %v821, 126
  %v863 = vpop.permute.xlu0 %862
  %864 = vrot.lane.b32.xlu0 %v822, 126
  %v865 = vpop.permute.xlu0 %864
  %866 = vrot.lane.b32.xlu0 %v823, 126
  %v867 = vpop.permute.xlu0 %866
  %868 = vrot.lane.b32.xlu0 %v824, 126
  %v869 = vpop.permute.xlu0 %868
  %870 = vrot.lane.b32.xlu0 %v825, 126
  %v871 = vpop.permute.xlu0 %870
  %872 = vrot.lane.b32.xlu0 %v826, 126
  %v873 = vpop.permute.xlu0 %872
  %874 = vrot.lane.b32.xlu0 %v827, 126
  %v875 = vpop.permute.xlu0 %874
  %v892 = vsub.f32 %v732, %v845
  %v893 = vsub.f32 %v733, %v847
  %v894 = vsub.f32 %v734, %v849
  %v895 = vsub.f32 %v735, %v851
  %v896 = vsub.f32 %v736, %v853
  %v897 = vsub.f32 %v737, %v855
  %v898 = vsub.f32 %v738, %v857
  %v899 = vsub.f32 %v739, %v859
  %v900 = vsub.f32 %v740, %v861
  %v901 = vsub.f32 %v741, %v863
  %v902 = vsub.f32 %v742, %v865
  %v903 = vsub.f32 %v743, %v867
  %v904 = vsub.f32 %v744, %v869
  %v905 = vsub.f32 %v745, %v871
  %v906 = vsub.f32 %v746, %v873
  %v907 = vsub.f32 %v747, %v875
  %v908 = vmul.f32 %v796, 0.5
  %v909 = vmul.f32 %v797, 0.5
  %v910 = vmul.f32 %v798, 0.5
  %v911 = vmul.f32 %v799, 0.5
  %v912 = vmul.f32 %v800, 0.5
  %v913 = vmul.f32 %v801, 0.5
  %v914 = vmul.f32 %v802, 0.5
  %v915 = vmul.f32 %v803, 0.5
  %v916 = vmul.f32 %v804, 0.5
  %v917 = vmul.f32 %v805, 0.5
  %v918 = vmul.f32 %v806, 0.5
  %v919 = vmul.f32 %v807, 0.5
  %v920 = vmul.f32 %v808, 0.5
  %v921 = vmul.f32 %v809, 0.5
  %v922 = vmul.f32 %v810, 0.5
  %v923 = vmul.f32 %v811, 0.5
  %940 = vrot.lane.b32.xlu0 %v908, 126
  %v941 = vpop.permute.xlu0 %940
  %942 = vrot.lane.b32.xlu0 %v909, 126
  %v943 = vpop.permute.xlu0 %942
  %944 = vrot.lane.b32.xlu0 %v910, 126
  %v945 = vpop.permute.xlu0 %944
  %946 = vrot.lane.b32.xlu0 %v911, 126
  %v947 = vpop.permute.xlu0 %946
  %948 = vrot.lane.b32.xlu0 %v912, 126
  %v949 = vpop.permute.xlu0 %948
  %950 = vrot.lane.b32.xlu0 %v913, 126
  %v951 = vpop.permute.xlu0 %950
  %952 = vrot.lane.b32.xlu0 %v914, 126
  %v953 = vpop.permute.xlu0 %952
  %954 = vrot.lane.b32.xlu0 %v915, 126
  %v955 = vpop.permute.xlu0 %954
  %956 = vrot.lane.b32.xlu0 %v916, 126
  %v957 = vpop.permute.xlu0 %956
  %958 = vrot.lane.b32.xlu0 %v917, 126
  %v959 = vpop.permute.xlu0 %958
  %960 = vrot.lane.b32.xlu0 %v918, 126
  %v961 = vpop.permute.xlu0 %960
  %962 = vrot.lane.b32.xlu0 %v919, 126
  %v963 = vpop.permute.xlu0 %962
  %964 = vrot.lane.b32.xlu0 %v920, 126
  %v965 = vpop.permute.xlu0 %964
  %966 = vrot.lane.b32.xlu0 %v921, 126
  %v967 = vpop.permute.xlu0 %966
  %968 = vrot.lane.b32.xlu0 %v922, 126
  %v969 = vpop.permute.xlu0 %968
  %970 = vrot.lane.b32.xlu0 %v923, 126
  %v971 = vpop.permute.xlu0 %970
  %v988 = vsub.f32 %v732, %v941
  %v989 = vsub.f32 %v733, %v943
  %v990 = vsub.f32 %v734, %v945
  %v991 = vsub.f32 %v735, %v947
  %v992 = vsub.f32 %v736, %v949
  %v993 = vsub.f32 %v737, %v951
  %v994 = vsub.f32 %v738, %v953
  %v995 = vsub.f32 %v739, %v955
  %v996 = vsub.f32 %v740, %v957
  %v997 = vsub.f32 %v741, %v959
  %v998 = vsub.f32 %v742, %v961
  %v999 = vsub.f32 %v743, %v963
  %v1000 = vsub.f32 %v744, %v965
  %v1001 = vsub.f32 %v745, %v967
  %v1002 = vsub.f32 %v746, %v969
  %v1003 = vsub.f32 %v747, %v971
  %v1004 = vadd.f32 %v732, %v845
  %v1005 = vadd.f32 %v733, %v847
  %v1006 = vadd.f32 %v734, %v849
  %v1007 = vadd.f32 %v735, %v851
  %v1008 = vadd.f32 %v736, %v853
  %v1009 = vadd.f32 %v737, %v855
  %v1010 = vadd.f32 %v738, %v857
  %v1011 = vadd.f32 %v739, %v859
  %v1012 = vadd.f32 %v740, %v861
  %v1013 = vadd.f32 %v741, %v863
  %v1014 = vadd.f32 %v742, %v865
  %v1015 = vadd.f32 %v743, %v867
  %v1016 = vadd.f32 %v744, %v869
  %v1017 = vadd.f32 %v745, %v871
  %v1018 = vadd.f32 %v746, %v873
  %v1019 = vadd.f32 %v747, %v875
  %v1020 = vadd.f32 %v732, %v941
  %v1021 = vadd.f32 %v733, %v943
  %v1022 = vadd.f32 %v734, %v945
  %v1023 = vadd.f32 %v735, %v947
  %v1024 = vadd.f32 %v736, %v949
  %v1025 = vadd.f32 %v737, %v951
  %v1026 = vadd.f32 %v738, %v953
  %v1027 = vadd.f32 %v739, %v955
  %v1028 = vadd.f32 %v740, %v957
  %v1029 = vadd.f32 %v741, %v959
  %v1030 = vadd.f32 %v742, %v961
  %v1031 = vadd.f32 %v743, %v963
  %v1032 = vadd.f32 %v744, %v965
  %v1033 = vadd.f32 %v745, %v967
  %v1034 = vadd.f32 %v746, %v969
  %v1035 = vadd.f32 %v747, %v971
  %1037 = vset.pattern.permute.xlu0 4
  %1038 = vperm.xlu0 %1037, %v669
  %v1039 = vpop.permute.xlu0 %1038
  %1042 = vset.pattern.permute.xlu0 4
  %1043 = vperm.xlu0 %1042, %v671
  %v1044 = vpop.permute.xlu0 %1043
  %1047 = vset.pattern.permute.xlu0 4
  %1048 = vperm.xlu0 %1047, %v673
  %v1049 = vpop.permute.xlu0 %1048
  %1052 = vset.pattern.permute.xlu0 4
  %1053 = vperm.xlu0 %1052, %v675
  %v1054 = vpop.permute.xlu0 %1053
  %1057 = vset.pattern.permute.xlu0 4
  %1058 = vperm.xlu0 %1057, %v677
  %v1059 = vpop.permute.xlu0 %1058
  %1062 = vset.pattern.permute.xlu0 4
  %1063 = vperm.xlu0 %1062, %v679
  %v1064 = vpop.permute.xlu0 %1063
  %1067 = vset.pattern.permute.xlu0 4
  %1068 = vperm.xlu0 %1067, %v681
  %v1069 = vpop.permute.xlu0 %1068
  %1072 = vset.pattern.permute.xlu0 4
  %1073 = vperm.xlu0 %1072, %v683
  %v1074 = vpop.permute.xlu0 %1073
  %1077 = vset.pattern.permute.xlu0 4
  %1078 = vperm.xlu0 %1077, %v685
  %v1079 = vpop.permute.xlu0 %1078
  %1082 = vset.pattern.permute.xlu0 4
  %1083 = vperm.xlu0 %1082, %v687
  %v1084 = vpop.permute.xlu0 %1083
  %1087 = vset.pattern.permute.xlu0 4
  %1088 = vperm.xlu0 %1087, %v689
  %v1089 = vpop.permute.xlu0 %1088
  %1092 = vset.pattern.permute.xlu0 4
  %1093 = vperm.xlu0 %1092, %v691
  %v1094 = vpop.permute.xlu0 %1093
  %1097 = vset.pattern.permute.xlu0 4
  %1098 = vperm.xlu0 %1097, %v693
  %v1099 = vpop.permute.xlu0 %1098
  %1102 = vset.pattern.permute.xlu0 4
  %1103 = vperm.xlu0 %1102, %v695
  %v1104 = vpop.permute.xlu0 %1103
  %1107 = vset.pattern.permute.xlu0 4
  %1108 = vperm.xlu0 %1107, %v697
  %v1109 = vpop.permute.xlu0 %1108
  %1112 = vset.pattern.permute.xlu0 4
  %1113 = vperm.xlu0 %1112, %v699
  %v1114 = vpop.permute.xlu0 %1113
  %v1116 = vmul.f32 %v669, %v1039
  %v1117 = vmul.f32 %v671, %v1044
  %v1118 = vmul.f32 %v673, %v1049
  %v1119 = vmul.f32 %v675, %v1054
  %v1120 = vmul.f32 %v677, %v1059
  %v1121 = vmul.f32 %v679, %v1064
  %v1122 = vmul.f32 %v681, %v1069
  %v1123 = vmul.f32 %v683, %v1074
  %v1124 = vmul.f32 %v685, %v1079
  %v1125 = vmul.f32 %v687, %v1084
  %v1126 = vmul.f32 %v689, %v1089
  %v1127 = vmul.f32 %v691, %v1094
  %v1128 = vmul.f32 %v693, %v1099
  %v1129 = vmul.f32 %v695, %v1104
  %v1130 = vmul.f32 %v697, %v1109
  %v1131 = vmul.f32 %v699, %v1114
  %1148 = vrot.lane.b32.xlu0 %v700, 8
  %v1149 = vpop.permute.xlu0 %1148
  %1150 = vrot.lane.b32.xlu0 %v701, 8
  %v1151 = vpop.permute.xlu0 %1150
  %1152 = vrot.lane.b32.xlu0 %v702, 8
  %v1153 = vpop.permute.xlu0 %1152
  %1154 = vrot.lane.b32.xlu0 %v703, 8
  %v1155 = vpop.permute.xlu0 %1154
  %1156 = vrot.lane.b32.xlu0 %v704, 8
  %v1157 = vpop.permute.xlu0 %1156
  %1158 = vrot.lane.b32.xlu0 %v705, 8
  %v1159 = vpop.permute.xlu0 %1158
  %1160 = vrot.lane.b32.xlu0 %v706, 8
  %v1161 = vpop.permute.xlu0 %1160
  %1162 = vrot.lane.b32.xlu0 %v707, 8
  %v1163 = vpop.permute.xlu0 %1162
  %1164 = vrot.lane.b32.xlu0 %v708, 8
  %v1165 = vpop.permute.xlu0 %1164
  %1166 = vrot.lane.b32.xlu0 %v709, 8
  %v1167 = vpop.permute.xlu0 %1166
  %1168 = vrot.lane.b32.xlu0 %v710, 8
  %v1169 = vpop.permute.xlu0 %1168
  %1170 = vrot.lane.b32.xlu0 %v711, 8
  %v1171 = vpop.permute.xlu0 %1170
  %1172 = vrot.lane.b32.xlu0 %v712, 8
  %v1173 = vpop.permute.xlu0 %1172
  %1174 = vrot.lane.b32.xlu0 %v713, 8
  %v1175 = vpop.permute.xlu0 %1174
  %1176 = vrot.lane.b32.xlu0 %v714, 8
  %v1177 = vpop.permute.xlu0 %1176
  %1178 = vrot.lane.b32.xlu0 %v715, 8
  %v1179 = vpop.permute.xlu0 %1178
  %v1196 = vadd.f32 %v716, %v1149
  %v1197 = vadd.f32 %v717, %v1151
  %v1198 = vadd.f32 %v718, %v1153
  %v1199 = vadd.f32 %v719, %v1155
  %v1200 = vadd.f32 %v720, %v1157
  %v1201 = vadd.f32 %v721, %v1159
  %v1202 = vadd.f32 %v722, %v1161
  %v1203 = vadd.f32 %v723, %v1163
  %v1204 = vadd.f32 %v724, %v1165
  %v1205 = vadd.f32 %v725, %v1167
  %v1206 = vadd.f32 %v726, %v1169
  %v1207 = vadd.f32 %v727, %v1171
  %v1208 = vadd.f32 %v728, %v1173
  %v1209 = vadd.f32 %v729, %v1175
  %v1210 = vadd.f32 %v730, %v1177
  %v1211 = vadd.f32 %v731, %v1179
  %v1212 = vmul.f32 %v764, 16.0
  %v1213 = vmul.f32 %v765, 16.0
  %v1214 = vmul.f32 %v766, 16.0
  %v1215 = vmul.f32 %v767, 16.0
  %v1216 = vmul.f32 %v768, 16.0
  %v1217 = vmul.f32 %v769, 16.0
  %v1218 = vmul.f32 %v770, 16.0
  %v1219 = vmul.f32 %v771, 16.0
  %v1220 = vmul.f32 %v772, 16.0
  %v1221 = vmul.f32 %v773, 16.0
  %v1222 = vmul.f32 %v774, 16.0
  %v1223 = vmul.f32 %v775, 16.0
  %v1224 = vmul.f32 %v776, 16.0
  %v1225 = vmul.f32 %v777, 16.0
  %v1226 = vmul.f32 %v778, 16.0
  %v1227 = vmul.f32 %v779, 16.0
  %v1228 = vmul.f32 %v764, 30.0
  %v1229 = vmul.f32 %v765, 30.0
  %v1230 = vmul.f32 %v766, 30.0
  %v1231 = vmul.f32 %v767, 30.0
  %v1232 = vmul.f32 %v768, 30.0
  %v1233 = vmul.f32 %v769, 30.0
  %v1234 = vmul.f32 %v770, 30.0
  %v1235 = vmul.f32 %v771, 30.0
  %v1236 = vmul.f32 %v772, 30.0
  %v1237 = vmul.f32 %v773, 30.0
  %v1238 = vmul.f32 %v774, 30.0
  %v1239 = vmul.f32 %v775, 30.0
  %v1240 = vmul.f32 %v776, 30.0
  %v1241 = vmul.f32 %v777, 30.0
  %v1242 = vmul.f32 %v778, 30.0
  %v1243 = vmul.f32 %v779, 30.0
  %v1244 = vmul.f32 %v1212, 0.5
  %v1245 = vmul.f32 %v1213, 0.5
  %v1246 = vmul.f32 %v1214, 0.5
  %v1247 = vmul.f32 %v1215, 0.5
  %v1248 = vmul.f32 %v1216, 0.5
  %v1249 = vmul.f32 %v1217, 0.5
  %v1250 = vmul.f32 %v1218, 0.5
  %v1251 = vmul.f32 %v1219, 0.5
  %v1252 = vmul.f32 %v1220, 0.5
  %v1253 = vmul.f32 %v1221, 0.5
  %v1254 = vmul.f32 %v1222, 0.5
  %v1255 = vmul.f32 %v1223, 0.5
  %v1256 = vmul.f32 %v1224, 0.5
  %v1257 = vmul.f32 %v1225, 0.5
  %v1258 = vmul.f32 %v1226, 0.5
  %v1259 = vmul.f32 %v1227, 0.5
  %1276 = vrot.lane.b32.xlu0 %v1244, 126
  %v1277 = vpop.permute.xlu0 %1276
  %1278 = vrot.lane.b32.xlu0 %v1245, 126
  %v1279 = vpop.permute.xlu0 %1278
  %1280 = vrot.lane.b32.xlu0 %v1246, 126
  %v1281 = vpop.permute.xlu0 %1280
  %1282 = vrot.lane.b32.xlu0 %v1247, 126
  %v1283 = vpop.permute.xlu0 %1282
  %1284 = vrot.lane.b32.xlu0 %v1248, 126
  %v1285 = vpop.permute.xlu0 %1284
  %1286 = vrot.lane.b32.xlu0 %v1249, 126
  %v1287 = vpop.permute.xlu0 %1286
  %1288 = vrot.lane.b32.xlu0 %v1250, 126
  %v1289 = vpop.permute.xlu0 %1288
  %1290 = vrot.lane.b32.xlu0 %v1251, 126
  %v1291 = vpop.permute.xlu0 %1290
  %1292 = vrot.lane.b32.xlu0 %v1252, 126
  %v1293 = vpop.permute.xlu0 %1292
  %1294 = vrot.lane.b32.xlu0 %v1253, 126
  %v1295 = vpop.permute.xlu0 %1294
  %1296 = vrot.lane.b32.xlu0 %v1254, 126
  %v1297 = vpop.permute.xlu0 %1296
  %1298 = vrot.lane.b32.xlu0 %v1255, 126
  %v1299 = vpop.permute.xlu0 %1298
  %1300 = vrot.lane.b32.xlu0 %v1256, 126
  %v1301 = vpop.permute.xlu0 %1300
  %1302 = vrot.lane.b32.xlu0 %v1257, 126
  %v1303 = vpop.permute.xlu0 %1302
  %1304 = vrot.lane.b32.xlu0 %v1258, 126
  %v1305 = vpop.permute.xlu0 %1304
  %1306 = vrot.lane.b32.xlu0 %v1259, 126
  %v1307 = vpop.permute.xlu0 %1306
  %v1324 = vsub.f32 %v1196, %v1277
  %v1325 = vsub.f32 %v1197, %v1279
  %v1326 = vsub.f32 %v1198, %v1281
  %v1327 = vsub.f32 %v1199, %v1283
  %v1328 = vsub.f32 %v1200, %v1285
  %v1329 = vsub.f32 %v1201, %v1287
  %v1330 = vsub.f32 %v1202, %v1289
  %v1331 = vsub.f32 %v1203, %v1291
  %v1332 = vsub.f32 %v1204, %v1293
  %v1333 = vsub.f32 %v1205, %v1295
  %v1334 = vsub.f32 %v1206, %v1297
  %v1335 = vsub.f32 %v1207, %v1299
  %v1336 = vsub.f32 %v1208, %v1301
  %v1337 = vsub.f32 %v1209, %v1303
  %v1338 = vsub.f32 %v1210, %v1305
  %v1339 = vsub.f32 %v1211, %v1307
  %v1340 = vmul.f32 %v1228, 0.5
  %v1341 = vmul.f32 %v1229, 0.5
  %v1342 = vmul.f32 %v1230, 0.5
  %v1343 = vmul.f32 %v1231, 0.5
  %v1344 = vmul.f32 %v1232, 0.5
  %v1345 = vmul.f32 %v1233, 0.5
  %v1346 = vmul.f32 %v1234, 0.5
  %v1347 = vmul.f32 %v1235, 0.5
  %v1348 = vmul.f32 %v1236, 0.5
  %v1349 = vmul.f32 %v1237, 0.5
  %v1350 = vmul.f32 %v1238, 0.5
  %v1351 = vmul.f32 %v1239, 0.5
  %v1352 = vmul.f32 %v1240, 0.5
  %v1353 = vmul.f32 %v1241, 0.5
  %v1354 = vmul.f32 %v1242, 0.5
  %v1355 = vmul.f32 %v1243, 0.5
  %1372 = vrot.lane.b32.xlu0 %v1340, 126
  %v1373 = vpop.permute.xlu0 %1372
  %1374 = vrot.lane.b32.xlu0 %v1341, 126
  %v1375 = vpop.permute.xlu0 %1374
  %1376 = vrot.lane.b32.xlu0 %v1342, 126
  %v1377 = vpop.permute.xlu0 %1376
  %1378 = vrot.lane.b32.xlu0 %v1343, 126
  %v1379 = vpop.permute.xlu0 %1378
  %1380 = vrot.lane.b32.xlu0 %v1344, 126
  %v1381 = vpop.permute.xlu0 %1380
  %1382 = vrot.lane.b32.xlu0 %v1345, 126
  %v1383 = vpop.permute.xlu0 %1382
  %1384 = vrot.lane.b32.xlu0 %v1346, 126
  %v1385 = vpop.permute.xlu0 %1384
  %1386 = vrot.lane.b32.xlu0 %v1347, 126
  %v1387 = vpop.permute.xlu0 %1386
  %1388 = vrot.lane.b32.xlu0 %v1348, 126
  %v1389 = vpop.permute.xlu0 %1388
  %1390 = vrot.lane.b32.xlu0 %v1349, 126
  %v1391 = vpop.permute.xlu0 %1390
  %1392 = vrot.lane.b32.xlu0 %v1350, 126
  %v1393 = vpop.permute.xlu0 %1392
  %1394 = vrot.lane.b32.xlu0 %v1351, 126
  %v1395 = vpop.permute.xlu0 %1394
  %1396 = vrot.lane.b32.xlu0 %v1352, 126
  %v1397 = vpop.permute.xlu0 %1396
  %1398 = vrot.lane.b32.xlu0 %v1353, 126
  %v1399 = vpop.permute.xlu0 %1398
  %1400 = vrot.lane.b32.xlu0 %v1354, 126
  %v1401 = vpop.permute.xlu0 %1400
  %1402 = vrot.lane.b32.xlu0 %v1355, 126
  %v1403 = vpop.permute.xlu0 %1402
  %v1420 = vsub.f32 %v1196, %v1373
  %v1421 = vsub.f32 %v1197, %v1375
  %v1422 = vsub.f32 %v1198, %v1377
  %v1423 = vsub.f32 %v1199, %v1379
  %v1424 = vsub.f32 %v1200, %v1381
  %v1425 = vsub.f32 %v1201, %v1383
  %v1426 = vsub.f32 %v1202, %v1385
  %v1427 = vsub.f32 %v1203, %v1387
  %v1428 = vsub.f32 %v1204, %v1389
  %v1429 = vsub.f32 %v1205, %v1391
  %v1430 = vsub.f32 %v1206, %v1393
  %v1431 = vsub.f32 %v1207, %v1395
  %v1432 = vsub.f32 %v1208, %v1397
  %v1433 = vsub.f32 %v1209, %v1399
  %v1434 = vsub.f32 %v1210, %v1401
  %v1435 = vsub.f32 %v1211, %v1403
  %v1436 = vadd.f32 %v1196, %v1277
  %v1437 = vadd.f32 %v1197, %v1279
  %v1438 = vadd.f32 %v1198, %v1281
  %v1439 = vadd.f32 %v1199, %v1283
  %v1440 = vadd.f32 %v1200, %v1285
  %v1441 = vadd.f32 %v1201, %v1287
  %v1442 = vadd.f32 %v1202, %v1289
  %v1443 = vadd.f32 %v1203, %v1291
  %v1444 = vadd.f32 %v1204, %v1293
  %v1445 = vadd.f32 %v1205, %v1295
  %v1446 = vadd.f32 %v1206, %v1297
  %v1447 = vadd.f32 %v1207, %v1299
  %v1448 = vadd.f32 %v1208, %v1301
  %v1449 = vadd.f32 %v1209, %v1303
  %v1450 = vadd.f32 %v1210, %v1305
  %v1451 = vadd.f32 %v1211, %v1307
  %v1452 = vadd.f32 %v1196, %v1373
  %v1453 = vadd.f32 %v1197, %v1375
  %v1454 = vadd.f32 %v1198, %v1377
  %v1455 = vadd.f32 %v1199, %v1379
  %v1456 = vadd.f32 %v1200, %v1381
  %v1457 = vadd.f32 %v1201, %v1383
  %v1458 = vadd.f32 %v1202, %v1385
  %v1459 = vadd.f32 %v1203, %v1387
  %v1460 = vadd.f32 %v1204, %v1389
  %v1461 = vadd.f32 %v1205, %v1391
  %v1462 = vadd.f32 %v1206, %v1393
  %v1463 = vadd.f32 %v1207, %v1395
  %v1464 = vadd.f32 %v1208, %v1397
  %v1465 = vadd.f32 %v1209, %v1399
  %v1466 = vadd.f32 %v1210, %v1401
  %v1467 = vadd.f32 %v1211, %v1403
  %1468 = vset.pattern.permute.xlu0 12
  %1469 = vperm.xlu0 %1468, %v669
  %v1470 = vpop.permute.xlu0 %1469
  %1472 = vset.pattern.permute.xlu0 12
  %1473 = vperm.xlu0 %1472, %v671
  %v1474 = vpop.permute.xlu0 %1473
  %1476 = vset.pattern.permute.xlu0 12
  %1477 = vperm.xlu0 %1476, %v673
  %v1478 = vpop.permute.xlu0 %1477
  %1480 = vset.pattern.permute.xlu0 12
  %1481 = vperm.xlu0 %1480, %v675
  %v1482 = vpop.permute.xlu0 %1481
  %1484 = vset.pattern.permute.xlu0 12
  %1485 = vperm.xlu0 %1484, %v677
  %v1486 = vpop.permute.xlu0 %1485
  %1488 = vset.pattern.permute.xlu0 12
  %1489 = vperm.xlu0 %1488, %v679
  %v1490 = vpop.permute.xlu0 %1489
  %1492 = vset.pattern.permute.xlu0 12
  %1493 = vperm.xlu0 %1492, %v681
  %v1494 = vpop.permute.xlu0 %1493
  %1496 = vset.pattern.permute.xlu0 12
  %1497 = vperm.xlu0 %1496, %v683
  %v1498 = vpop.permute.xlu0 %1497
  %1500 = vset.pattern.permute.xlu0 12
  %1501 = vperm.xlu0 %1500, %v685
  %v1502 = vpop.permute.xlu0 %1501
  %1504 = vset.pattern.permute.xlu0 12
  %1505 = vperm.xlu0 %1504, %v687
  %v1506 = vpop.permute.xlu0 %1505
  %1508 = vset.pattern.permute.xlu0 12
  %1509 = vperm.xlu0 %1508, %v689
  %v1510 = vpop.permute.xlu0 %1509
  %1512 = vset.pattern.permute.xlu0 12
  %1513 = vperm.xlu0 %1512, %v691
  %v1514 = vpop.permute.xlu0 %1513
  %1516 = vset.pattern.permute.xlu0 12
  %1517 = vperm.xlu0 %1516, %v693
  %v1518 = vpop.permute.xlu0 %1517
  %1520 = vset.pattern.permute.xlu0 12
  %1521 = vperm.xlu0 %1520, %v695
  %v1522 = vpop.permute.xlu0 %1521
  %1524 = vset.pattern.permute.xlu0 12
  %1525 = vperm.xlu0 %1524, %v697
  %v1526 = vpop.permute.xlu0 %1525
  %1528 = vset.pattern.permute.xlu0 12
  %1529 = vperm.xlu0 %1528, %v699
  %v1530 = vpop.permute.xlu0 %1529
  %v1532 = vmul.f32 %v669, %v1470
  %v1533 = vmul.f32 %v671, %v1474
  %v1534 = vmul.f32 %v673, %v1478
  %v1535 = vmul.f32 %v675, %v1482
  %v1536 = vmul.f32 %v677, %v1486
  %v1537 = vmul.f32 %v679, %v1490
  %v1538 = vmul.f32 %v681, %v1494
  %v1539 = vmul.f32 %v683, %v1498
  %v1540 = vmul.f32 %v685, %v1502
  %v1541 = vmul.f32 %v687, %v1506
  %v1542 = vmul.f32 %v689, %v1510
  %v1543 = vmul.f32 %v691, %v1514
  %v1544 = vmul.f32 %v693, %v1518
  %v1545 = vmul.f32 %v695, %v1522
  %v1546 = vmul.f32 %v697, %v1526
  %v1547 = vmul.f32 %v699, %v1530
  %1548 = vrot.lane.b32.xlu0 %v700, 16
  %v1549 = vpop.permute.xlu0 %1548
  %1550 = vrot.lane.b32.xlu0 %v701, 16
  %v1551 = vpop.permute.xlu0 %1550
  %1552 = vrot.lane.b32.xlu0 %v702, 16
  %v1553 = vpop.permute.xlu0 %1552
  %1554 = vrot.lane.b32.xlu0 %v703, 16
  %v1555 = vpop.permute.xlu0 %1554
  %1556 = vrot.lane.b32.xlu0 %v704, 16
  %v1557 = vpop.permute.xlu0 %1556
  %1558 = vrot.lane.b32.xlu0 %v705, 16
  %v1559 = vpop.permute.xlu0 %1558
  %1560 = vrot.lane.b32.xlu0 %v706, 16
  %v1561 = vpop.permute.xlu0 %1560
  %1562 = vrot.lane.b32.xlu0 %v707, 16
  %v1563 = vpop.permute.xlu0 %1562
  %1564 = vrot.lane.b32.xlu0 %v708, 16
  %v1565 = vpop.permute.xlu0 %1564
  %1566 = vrot.lane.b32.xlu0 %v709, 16
  %v1567 = vpop.permute.xlu0 %1566
  %1568 = vrot.lane.b32.xlu0 %v710, 16
  %v1569 = vpop.permute.xlu0 %1568
  %1570 = vrot.lane.b32.xlu0 %v711, 16
  %v1571 = vpop.permute.xlu0 %1570
  %1572 = vrot.lane.b32.xlu0 %v712, 16
  %v1573 = vpop.permute.xlu0 %1572
  %1574 = vrot.lane.b32.xlu0 %v713, 16
  %v1575 = vpop.permute.xlu0 %1574
  %1576 = vrot.lane.b32.xlu0 %v714, 16
  %v1577 = vpop.permute.xlu0 %1576
  %1578 = vrot.lane.b32.xlu0 %v715, 16
  %v1579 = vpop.permute.xlu0 %1578
  %v1596 = vadd.f32 %v716, %v1549
  %v1597 = vadd.f32 %v717, %v1551
  %v1598 = vadd.f32 %v718, %v1553
  %v1599 = vadd.f32 %v719, %v1555
  %v1600 = vadd.f32 %v720, %v1557
  %v1601 = vadd.f32 %v721, %v1559
  %v1602 = vadd.f32 %v722, %v1561
  %v1603 = vadd.f32 %v723, %v1563
  %v1604 = vadd.f32 %v724, %v1565
  %v1605 = vadd.f32 %v725, %v1567
  %v1606 = vadd.f32 %v726, %v1569
  %v1607 = vadd.f32 %v727, %v1571
  %v1608 = vadd.f32 %v728, %v1573
  %v1609 = vadd.f32 %v729, %v1575
  %v1610 = vadd.f32 %v730, %v1577
  %v1611 = vadd.f32 %v731, %v1579
  %v1612 = vmul.f32 %v764, 33.0
  %v1613 = vmul.f32 %v765, 33.0
  %v1614 = vmul.f32 %v766, 33.0
  %v1615 = vmul.f32 %v767, 33.0
  %v1616 = vmul.f32 %v768, 33.0
  %v1617 = vmul.f32 %v769, 33.0
  %v1618 = vmul.f32 %v770, 33.0
  %v1619 = vmul.f32 %v771, 33.0
  %v1620 = vmul.f32 %v772, 33.0
  %v1621 = vmul.f32 %v773, 33.0
  %v1622 = vmul.f32 %v774, 33.0
  %v1623 = vmul.f32 %v775, 33.0
  %v1624 = vmul.f32 %v776, 33.0
  %v1625 = vmul.f32 %v777, 33.0
  %v1626 = vmul.f32 %v778, 33.0
  %v1627 = vmul.f32 %v779, 33.0
  %v1628 = vmul.f32 %v764, 23.0
  %v1629 = vmul.f32 %v765, 23.0
  %v1630 = vmul.f32 %v766, 23.0
  %v1631 = vmul.f32 %v767, 23.0
  %v1632 = vmul.f32 %v768, 23.0
  %v1633 = vmul.f32 %v769, 23.0
  %v1634 = vmul.f32 %v770, 23.0
  %v1635 = vmul.f32 %v771, 23.0
  %v1636 = vmul.f32 %v772, 23.0
  %v1637 = vmul.f32 %v773, 23.0
  %v1638 = vmul.f32 %v774, 23.0
  %v1639 = vmul.f32 %v775, 23.0
  %v1640 = vmul.f32 %v776, 23.0
  %v1641 = vmul.f32 %v777, 23.0
  %v1642 = vmul.f32 %v778, 23.0
  %v1643 = vmul.f32 %v779, 23.0
  %v1644 = vmul.f32 %v1612, 0.5
  %v1645 = vmul.f32 %v1613, 0.5
  %v1646 = vmul.f32 %v1614, 0.5
  %v1647 = vmul.f32 %v1615, 0.5
  %v1648 = vmul.f32 %v1616, 0.5
  %v1649 = vmul.f32 %v1617, 0.5
  %v1650 = vmul.f32 %v1618, 0.5
  %v1651 = vmul.f32 %v1619, 0.5
  %v1652 = vmul.f32 %v1620, 0.5
  %v1653 = vmul.f32 %v1621, 0.5
  %v1654 = vmul.f32 %v1622, 0.5
  %v1655 = vmul.f32 %v1623, 0.5
  %v1656 = vmul.f32 %v1624, 0.5
  %v1657 = vmul.f32 %v1625, 0.5
  %v1658 = vmul.f32 %v1626, 0.5
  %v1659 = vmul.f32 %v1627, 0.5
  %1676 = vrot.lane.b32.xlu0 %v1644, 126
  %v1677 = vpop.permute.xlu0 %1676
  %1678 = vrot.lane.b32.xlu0 %v1645, 126
  %v1679 = vpop.permute.xlu0 %1678
  %1680 = vrot.lane.b32.xlu0 %v1646, 126
  %v1681 = vpop.permute.xlu0 %1680
  %1682 = vrot.lane.b32.xlu0 %v1647, 126
  %v1683 = vpop.permute.xlu0 %1682
  %1684 = vrot.lane.b32.xlu0 %v1648, 126
  %v1685 = vpop.permute.xlu0 %1684
  %1686 = vrot.lane.b32.xlu0 %v1649, 126
  %v1687 = vpop.permute.xlu0 %1686
  %1688 = vrot.lane.b32.xlu0 %v1650, 126
  %v1689 = vpop.permute.xlu0 %1688
  %1690 = vrot.lane.b32.xlu0 %v1651, 126
  %v1691 = vpop.permute.xlu0 %1690
  %1692 = vrot.lane.b32.xlu0 %v1652, 126
  %v1693 = vpop.permute.xlu0 %1692
  %1694 = vrot.lane.b32.xlu0 %v1653, 126
  %v1695 = vpop.permute.xlu0 %1694
  %1696 = vrot.lane.b32.xlu0 %v1654, 126
  %v1697 = vpop.permute.xlu0 %1696
  %1698 = vrot.lane.b32.xlu0 %v1655, 126
  %v1699 = vpop.permute.xlu0 %1698
  %1700 = vrot.lane.b32.xlu0 %v1656, 126
  %v1701 = vpop.permute.xlu0 %1700
  %1702 = vrot.lane.b32.xlu0 %v1657, 126
  %v1703 = vpop.permute.xlu0 %1702
  %1704 = vrot.lane.b32.xlu0 %v1658, 126
  %v1705 = vpop.permute.xlu0 %1704
  %1706 = vrot.lane.b32.xlu0 %v1659, 126
  %v1707 = vpop.permute.xlu0 %1706
  %v1724 = vsub.f32 %v1596, %v1677
  %v1725 = vsub.f32 %v1597, %v1679
  %v1726 = vsub.f32 %v1598, %v1681
  %v1727 = vsub.f32 %v1599, %v1683
  %v1728 = vsub.f32 %v1600, %v1685
  %v1729 = vsub.f32 %v1601, %v1687
  %v1730 = vsub.f32 %v1602, %v1689
  %v1731 = vsub.f32 %v1603, %v1691
  %v1732 = vsub.f32 %v1604, %v1693
  %v1733 = vsub.f32 %v1605, %v1695
  %v1734 = vsub.f32 %v1606, %v1697
  %v1735 = vsub.f32 %v1607, %v1699
  %v1736 = vsub.f32 %v1608, %v1701
  %v1737 = vsub.f32 %v1609, %v1703
  %v1738 = vsub.f32 %v1610, %v1705
  %v1739 = vsub.f32 %v1611, %v1707
  %v1740 = vmul.f32 %v1628, 0.5
  %v1741 = vmul.f32 %v1629, 0.5
  %v1742 = vmul.f32 %v1630, 0.5
  %v1743 = vmul.f32 %v1631, 0.5
  %v1744 = vmul.f32 %v1632, 0.5
  %v1745 = vmul.f32 %v1633, 0.5
  %v1746 = vmul.f32 %v1634, 0.5
  %v1747 = vmul.f32 %v1635, 0.5
  %v1748 = vmul.f32 %v1636, 0.5
  %v1749 = vmul.f32 %v1637, 0.5
  %v1750 = vmul.f32 %v1638, 0.5
  %v1751 = vmul.f32 %v1639, 0.5
  %v1752 = vmul.f32 %v1640, 0.5
  %v1753 = vmul.f32 %v1641, 0.5
  %v1754 = vmul.f32 %v1642, 0.5
  %v1755 = vmul.f32 %v1643, 0.5
  %1772 = vrot.lane.b32.xlu0 %v1740, 126
  %v1773 = vpop.permute.xlu0 %1772
  %1774 = vrot.lane.b32.xlu0 %v1741, 126
  %v1775 = vpop.permute.xlu0 %1774
  %1776 = vrot.lane.b32.xlu0 %v1742, 126
  %v1777 = vpop.permute.xlu0 %1776
  %1778 = vrot.lane.b32.xlu0 %v1743, 126
  %v1779 = vpop.permute.xlu0 %1778
  %1780 = vrot.lane.b32.xlu0 %v1744, 126
  %v1781 = vpop.permute.xlu0 %1780
  %1782 = vrot.lane.b32.xlu0 %v1745, 126
  %v1783 = vpop.permute.xlu0 %1782
  %1784 = vrot.lane.b32.xlu0 %v1746, 126
  %v1785 = vpop.permute.xlu0 %1784
  %1786 = vrot.lane.b32.xlu0 %v1747, 126
  %v1787 = vpop.permute.xlu0 %1786
  %1788 = vrot.lane.b32.xlu0 %v1748, 126
  %v1789 = vpop.permute.xlu0 %1788
  %1790 = vrot.lane.b32.xlu0 %v1749, 126
  %v1791 = vpop.permute.xlu0 %1790
  %1792 = vrot.lane.b32.xlu0 %v1750, 126
  %v1793 = vpop.permute.xlu0 %1792
  %1794 = vrot.lane.b32.xlu0 %v1751, 126
  %v1795 = vpop.permute.xlu0 %1794
  %1796 = vrot.lane.b32.xlu0 %v1752, 126
  %v1797 = vpop.permute.xlu0 %1796
  %1798 = vrot.lane.b32.xlu0 %v1753, 126
  %v1799 = vpop.permute.xlu0 %1798
  %1800 = vrot.lane.b32.xlu0 %v1754, 126
  %v1801 = vpop.permute.xlu0 %1800
  %1802 = vrot.lane.b32.xlu0 %v1755, 126
  %v1803 = vpop.permute.xlu0 %1802
  %v1820 = vsub.f32 %v1596, %v1773
  %v1821 = vsub.f32 %v1597, %v1775
  %v1822 = vsub.f32 %v1598, %v1777
  %v1823 = vsub.f32 %v1599, %v1779
  %v1824 = vsub.f32 %v1600, %v1781
  %v1825 = vsub.f32 %v1601, %v1783
  %v1826 = vsub.f32 %v1602, %v1785
  %v1827 = vsub.f32 %v1603, %v1787
  %v1828 = vsub.f32 %v1604, %v1789
  %v1829 = vsub.f32 %v1605, %v1791
  %v1830 = vsub.f32 %v1606, %v1793
  %v1831 = vsub.f32 %v1607, %v1795
  %v1832 = vsub.f32 %v1608, %v1797
  %v1833 = vsub.f32 %v1609, %v1799
  %v1834 = vsub.f32 %v1610, %v1801
  %v1835 = vsub.f32 %v1611, %v1803
  %v1836 = vadd.f32 %v1596, %v1677
  %v1837 = vadd.f32 %v1597, %v1679
  %v1838 = vadd.f32 %v1598, %v1681
  %v1839 = vadd.f32 %v1599, %v1683
  %v1840 = vadd.f32 %v1600, %v1685
  %v1841 = vadd.f32 %v1601, %v1687
  %v1842 = vadd.f32 %v1602, %v1689
  %v1843 = vadd.f32 %v1603, %v1691
  %v1844 = vadd.f32 %v1604, %v1693
  %v1845 = vadd.f32 %v1605, %v1695
  %v1846 = vadd.f32 %v1606, %v1697
  %v1847 = vadd.f32 %v1607, %v1699
  %v1848 = vadd.f32 %v1608, %v1701
  %v1849 = vadd.f32 %v1609, %v1703
  %v1850 = vadd.f32 %v1610, %v1705
  %v1851 = vadd.f32 %v1611, %v1707
  %v1852 = vadd.f32 %v1596, %v1773
  %v1853 = vadd.f32 %v1597, %v1775
  %v1854 = vadd.f32 %v1598, %v1777
  %v1855 = vadd.f32 %v1599, %v1779
  %v1856 = vadd.f32 %v1600, %v1781
  %v1857 = vadd.f32 %v1601, %v1783
  %v1858 = vadd.f32 %v1602, %v1785
  %v1859 = vadd.f32 %v1603, %v1787
  %v1860 = vadd.f32 %v1604, %v1789
  %v1861 = vadd.f32 %v1605, %v1791
  %v1862 = vadd.f32 %v1606, %v1793
  %v1863 = vadd.f32 %v1607, %v1795
  %v1864 = vadd.f32 %v1608, %v1797
  %v1865 = vadd.f32 %v1609, %v1799
  %v1866 = vadd.f32 %v1610, %v1801
  %v1867 = vadd.f32 %v1611, %v1803
  %1868 = vset.pattern.permute.xlu0 20
  %1869 = vperm.xlu0 %1868, %v669
  %v1870 = vpop.permute.xlu0 %1869
  %1872 = vset.pattern.permute.xlu0 20
  %1873 = vperm.xlu0 %1872, %v671
  %v1874 = vpop.permute.xlu0 %1873
  %1876 = vset.pattern.permute.xlu0 20
  %1877 = vperm.xlu0 %1876, %v673
  %v1878 = vpop.permute.xlu0 %1877
  %1880 = vset.pattern.permute.xlu0 20
  %1881 = vperm.xlu0 %1880, %v675
  %v1882 = vpop.permute.xlu0 %1881
  %1884 = vset.pattern.permute.xlu0 20
  %1885 = vperm.xlu0 %1884, %v677
  %v1886 = vpop.permute.xlu0 %1885
  %1888 = vset.pattern.permute.xlu0 20
  %1889 = vperm.xlu0 %1888, %v679
  %v1890 = vpop.permute.xlu0 %1889
  %1892 = vset.pattern.permute.xlu0 20
  %1893 = vperm.xlu0 %1892, %v681
  %v1894 = vpop.permute.xlu0 %1893
  %1896 = vset.pattern.permute.xlu0 20
  %1897 = vperm.xlu0 %1896, %v683
  %v1898 = vpop.permute.xlu0 %1897
  %1900 = vset.pattern.permute.xlu0 20
  %1901 = vperm.xlu0 %1900, %v685
  %v1902 = vpop.permute.xlu0 %1901
  %1904 = vset.pattern.permute.xlu0 20
  %1905 = vperm.xlu0 %1904, %v687
  %v1906 = vpop.permute.xlu0 %1905
  %1908 = vset.pattern.permute.xlu0 20
  %1909 = vperm.xlu0 %1908, %v689
  %v1910 = vpop.permute.xlu0 %1909
  %1912 = vset.pattern.permute.xlu0 20
  %1913 = vperm.xlu0 %1912, %v691
  %v1914 = vpop.permute.xlu0 %1913
  %1916 = vset.pattern.permute.xlu0 20
  %1917 = vperm.xlu0 %1916, %v693
  %v1918 = vpop.permute.xlu0 %1917
  %1920 = vset.pattern.permute.xlu0 20
  %1921 = vperm.xlu0 %1920, %v695
  %v1922 = vpop.permute.xlu0 %1921
  %1924 = vset.pattern.permute.xlu0 20
  %1925 = vperm.xlu0 %1924, %v697
  %v1926 = vpop.permute.xlu0 %1925
  %1928 = vset.pattern.permute.xlu0 20
  %1929 = vperm.xlu0 %1928, %v699
  %v1930 = vpop.permute.xlu0 %1929
  %v1932 = vmul.f32 %v669, %v1870
  %v1933 = vmul.f32 %v671, %v1874
  %v1934 = vmul.f32 %v673, %v1878
  %v1935 = vmul.f32 %v675, %v1882
  %v1936 = vmul.f32 %v677, %v1886
  %v1937 = vmul.f32 %v679, %v1890
  %v1938 = vmul.f32 %v681, %v1894
  %v1939 = vmul.f32 %v683, %v1898
  %v1940 = vmul.f32 %v685, %v1902
  %v1941 = vmul.f32 %v687, %v1906
  %v1942 = vmul.f32 %v689, %v1910
  %v1943 = vmul.f32 %v691, %v1914
  %v1944 = vmul.f32 %v693, %v1918
  %v1945 = vmul.f32 %v695, %v1922
  %v1946 = vmul.f32 %v697, %v1926
  %v1947 = vmul.f32 %v699, %v1930
  %1964 = vrot.lane.b32.xlu0 %v1004, 2
  %v1965 = vpop.permute.xlu0 %1964
  %1966 = vrot.lane.b32.xlu0 %v1005, 2
  %v1967 = vpop.permute.xlu0 %1966
  %1968 = vrot.lane.b32.xlu0 %v1006, 2
  %v1969 = vpop.permute.xlu0 %1968
  %1970 = vrot.lane.b32.xlu0 %v1007, 2
  %v1971 = vpop.permute.xlu0 %1970
  %1972 = vrot.lane.b32.xlu0 %v1008, 2
  %v1973 = vpop.permute.xlu0 %1972
  %1974 = vrot.lane.b32.xlu0 %v1009, 2
  %v1975 = vpop.permute.xlu0 %1974
  %1976 = vrot.lane.b32.xlu0 %v1010, 2
  %v1977 = vpop.permute.xlu0 %1976
  %1978 = vrot.lane.b32.xlu0 %v1011, 2
  %v1979 = vpop.permute.xlu0 %1978
  %1980 = vrot.lane.b32.xlu0 %v1012, 2
  %v1981 = vpop.permute.xlu0 %1980
  %1982 = vrot.lane.b32.xlu0 %v1013, 2
  %v1983 = vpop.permute.xlu0 %1982
  %1984 = vrot.lane.b32.xlu0 %v1014, 2
  %v1985 = vpop.permute.xlu0 %1984
  %1986 = vrot.lane.b32.xlu0 %v1015, 2
  %v1987 = vpop.permute.xlu0 %1986
  %1988 = vrot.lane.b32.xlu0 %v1016, 2
  %v1989 = vpop.permute.xlu0 %1988
  %1990 = vrot.lane.b32.xlu0 %v1017, 2
  %v1991 = vpop.permute.xlu0 %1990
  %1992 = vrot.lane.b32.xlu0 %v1018, 2
  %v1993 = vpop.permute.xlu0 %1992
  %1994 = vrot.lane.b32.xlu0 %v1019, 2
  %v1995 = vpop.permute.xlu0 %1994
  %2028 = vrot.lane.b32.xlu0 %v1020, 2
  %v2029 = vpop.permute.xlu0 %2028
  %2030 = vrot.lane.b32.xlu0 %v1021, 2
  %v2031 = vpop.permute.xlu0 %2030
  %2032 = vrot.lane.b32.xlu0 %v1022, 2
  %v2033 = vpop.permute.xlu0 %2032
  %2034 = vrot.lane.b32.xlu0 %v1023, 2
  %v2035 = vpop.permute.xlu0 %2034
  %2036 = vrot.lane.b32.xlu0 %v1024, 2
  %v2037 = vpop.permute.xlu0 %2036
  %2038 = vrot.lane.b32.xlu0 %v1025, 2
  %v2039 = vpop.permute.xlu0 %2038
  %2040 = vrot.lane.b32.xlu0 %v1026, 2
  %v2041 = vpop.permute.xlu0 %2040
  %2042 = vrot.lane.b32.xlu0 %v1027, 2
  %v2043 = vpop.permute.xlu0 %2042
  %2044 = vrot.lane.b32.xlu0 %v1028, 2
  %v2045 = vpop.permute.xlu0 %2044
  %2046 = vrot.lane.b32.xlu0 %v1029, 2
  %v2047 = vpop.permute.xlu0 %2046
  %2048 = vrot.lane.b32.xlu0 %v1030, 2
  %v2049 = vpop.permute.xlu0 %2048
  %2050 = vrot.lane.b32.xlu0 %v1031, 2
  %v2051 = vpop.permute.xlu0 %2050
  %2052 = vrot.lane.b32.xlu0 %v1032, 2
  %v2053 = vpop.permute.xlu0 %2052
  %2054 = vrot.lane.b32.xlu0 %v1033, 2
  %v2055 = vpop.permute.xlu0 %2054
  %2056 = vrot.lane.b32.xlu0 %v1034, 2
  %v2057 = vpop.permute.xlu0 %2056
  %2058 = vrot.lane.b32.xlu0 %v1035, 2
  %v2059 = vpop.permute.xlu0 %2058
  %2092 = vrot.lane.b32.xlu0 %v1324, 124
  %v2093 = vpop.permute.xlu0 %2092
  %2094 = vrot.lane.b32.xlu0 %v1325, 124
  %v2095 = vpop.permute.xlu0 %2094
  %2096 = vrot.lane.b32.xlu0 %v1326, 124
  %v2097 = vpop.permute.xlu0 %2096
  %2098 = vrot.lane.b32.xlu0 %v1327, 124
  %v2099 = vpop.permute.xlu0 %2098
  %2100 = vrot.lane.b32.xlu0 %v1328, 124
  %v2101 = vpop.permute.xlu0 %2100
  %2102 = vrot.lane.b32.xlu0 %v1329, 124
  %v2103 = vpop.permute.xlu0 %2102
  %2104 = vrot.lane.b32.xlu0 %v1330, 124
  %v2105 = vpop.permute.xlu0 %2104
  %2106 = vrot.lane.b32.xlu0 %v1331, 124
  %v2107 = vpop.permute.xlu0 %2106
  %2108 = vrot.lane.b32.xlu0 %v1332, 124
  %v2109 = vpop.permute.xlu0 %2108
  %2110 = vrot.lane.b32.xlu0 %v1333, 124
  %v2111 = vpop.permute.xlu0 %2110
  %2112 = vrot.lane.b32.xlu0 %v1334, 124
  %v2113 = vpop.permute.xlu0 %2112
  %2114 = vrot.lane.b32.xlu0 %v1335, 124
  %v2115 = vpop.permute.xlu0 %2114
  %2116 = vrot.lane.b32.xlu0 %v1336, 124
  %v2117 = vpop.permute.xlu0 %2116
  %2118 = vrot.lane.b32.xlu0 %v1337, 124
  %v2119 = vpop.permute.xlu0 %2118
  %2120 = vrot.lane.b32.xlu0 %v1338, 124
  %v2121 = vpop.permute.xlu0 %2120
  %2122 = vrot.lane.b32.xlu0 %v1339, 124
  %v2123 = vpop.permute.xlu0 %2122
  %2156 = vrot.lane.b32.xlu0 %v1420, 124
  %v2157 = vpop.permute.xlu0 %2156
  %2158 = vrot.lane.b32.xlu0 %v1421, 124
  %v2159 = vpop.permute.xlu0 %2158
  %2160 = vrot.lane.b32.xlu0 %v1422, 124
  %v2161 = vpop.permute.xlu0 %2160
  %2162 = vrot.lane.b32.xlu0 %v1423, 124
  %v2163 = vpop.permute.xlu0 %2162
  %2164 = vrot.lane.b32.xlu0 %v1424, 124
  %v2165 = vpop.permute.xlu0 %2164
  %2166 = vrot.lane.b32.xlu0 %v1425, 124
  %v2167 = vpop.permute.xlu0 %2166
  %2168 = vrot.lane.b32.xlu0 %v1426, 124
  %v2169 = vpop.permute.xlu0 %2168
  %2170 = vrot.lane.b32.xlu0 %v1427, 124
  %v2171 = vpop.permute.xlu0 %2170
  %2172 = vrot.lane.b32.xlu0 %v1428, 124
  %v2173 = vpop.permute.xlu0 %2172
  %2174 = vrot.lane.b32.xlu0 %v1429, 124
  %v2175 = vpop.permute.xlu0 %2174
  %2176 = vrot.lane.b32.xlu0 %v1430, 124
  %v2177 = vpop.permute.xlu0 %2176
  %2178 = vrot.lane.b32.xlu0 %v1431, 124
  %v2179 = vpop.permute.xlu0 %2178
  %2180 = vrot.lane.b32.xlu0 %v1432, 124
  %v2181 = vpop.permute.xlu0 %2180
  %2182 = vrot.lane.b32.xlu0 %v1433, 124
  %v2183 = vpop.permute.xlu0 %2182
  %2184 = vrot.lane.b32.xlu0 %v1434, 124
  %v2185 = vpop.permute.xlu0 %2184
  %2186 = vrot.lane.b32.xlu0 %v1435, 124
  %v2187 = vpop.permute.xlu0 %2186
  %2220 = vrot.lane.b32.xlu0 %v1436, 126
  %v2221 = vpop.permute.xlu0 %2220
  %2222 = vrot.lane.b32.xlu0 %v1437, 126
  %v2223 = vpop.permute.xlu0 %2222
  %2224 = vrot.lane.b32.xlu0 %v1438, 126
  %v2225 = vpop.permute.xlu0 %2224
  %2226 = vrot.lane.b32.xlu0 %v1439, 126
  %v2227 = vpop.permute.xlu0 %2226
  %2228 = vrot.lane.b32.xlu0 %v1440, 126
  %v2229 = vpop.permute.xlu0 %2228
  %2230 = vrot.lane.b32.xlu0 %v1441, 126
  %v2231 = vpop.permute.xlu0 %2230
  %2232 = vrot.lane.b32.xlu0 %v1442, 126
  %v2233 = vpop.permute.xlu0 %2232
  %2234 = vrot.lane.b32.xlu0 %v1443, 126
  %v2235 = vpop.permute.xlu0 %2234
  %2236 = vrot.lane.b32.xlu0 %v1444, 126
  %v2237 = vpop.permute.xlu0 %2236
  %2238 = vrot.lane.b32.xlu0 %v1445, 126
  %v2239 = vpop.permute.xlu0 %2238
  %2240 = vrot.lane.b32.xlu0 %v1446, 126
  %v2241 = vpop.permute.xlu0 %2240
  %2242 = vrot.lane.b32.xlu0 %v1447, 126
  %v2243 = vpop.permute.xlu0 %2242
  %2244 = vrot.lane.b32.xlu0 %v1448, 126
  %v2245 = vpop.permute.xlu0 %2244
  %2246 = vrot.lane.b32.xlu0 %v1449, 126
  %v2247 = vpop.permute.xlu0 %2246
  %2248 = vrot.lane.b32.xlu0 %v1450, 126
  %v2249 = vpop.permute.xlu0 %2248
  %2250 = vrot.lane.b32.xlu0 %v1451, 126
  %v2251 = vpop.permute.xlu0 %2250
  %2284 = vrot.lane.b32.xlu0 %v1452, 126
  %v2285 = vpop.permute.xlu0 %2284
  %2286 = vrot.lane.b32.xlu0 %v1453, 126
  %v2287 = vpop.permute.xlu0 %2286
  %2288 = vrot.lane.b32.xlu0 %v1454, 126
  %v2289 = vpop.permute.xlu0 %2288
  %2290 = vrot.lane.b32.xlu0 %v1455, 126
  %v2291 = vpop.permute.xlu0 %2290
  %2292 = vrot.lane.b32.xlu0 %v1456, 126
  %v2293 = vpop.permute.xlu0 %2292
  %2294 = vrot.lane.b32.xlu0 %v1457, 126
  %v2295 = vpop.permute.xlu0 %2294
  %2296 = vrot.lane.b32.xlu0 %v1458, 126
  %v2297 = vpop.permute.xlu0 %2296
  %2298 = vrot.lane.b32.xlu0 %v1459, 126
  %v2299 = vpop.permute.xlu0 %2298
  %2300 = vrot.lane.b32.xlu0 %v1460, 126
  %v2301 = vpop.permute.xlu0 %2300
  %2302 = vrot.lane.b32.xlu0 %v1461, 126
  %v2303 = vpop.permute.xlu0 %2302
  %2304 = vrot.lane.b32.xlu0 %v1462, 126
  %v2305 = vpop.permute.xlu0 %2304
  %2306 = vrot.lane.b32.xlu0 %v1463, 126
  %v2307 = vpop.permute.xlu0 %2306
  %2308 = vrot.lane.b32.xlu0 %v1464, 126
  %v2309 = vpop.permute.xlu0 %2308
  %2310 = vrot.lane.b32.xlu0 %v1465, 126
  %v2311 = vpop.permute.xlu0 %2310
  %2312 = vrot.lane.b32.xlu0 %v1466, 126
  %v2313 = vpop.permute.xlu0 %2312
  %2314 = vrot.lane.b32.xlu0 %v1467, 126
  %v2315 = vpop.permute.xlu0 %2314
  %2348 = vrot.lane.b32.xlu0 %v1724, 120
  %v2349 = vpop.permute.xlu0 %2348
  %2350 = vrot.lane.b32.xlu0 %v1725, 120
  %v2351 = vpop.permute.xlu0 %2350
  %2352 = vrot.lane.b32.xlu0 %v1726, 120
  %v2353 = vpop.permute.xlu0 %2352
  %2354 = vrot.lane.b32.xlu0 %v1727, 120
  %v2355 = vpop.permute.xlu0 %2354
  %2356 = vrot.lane.b32.xlu0 %v1728, 120
  %v2357 = vpop.permute.xlu0 %2356
  %2358 = vrot.lane.b32.xlu0 %v1729, 120
  %v2359 = vpop.permute.xlu0 %2358
  %2360 = vrot.lane.b32.xlu0 %v1730, 120
  %v2361 = vpop.permute.xlu0 %2360
  %2362 = vrot.lane.b32.xlu0 %v1731, 120
  %v2363 = vpop.permute.xlu0 %2362
  %2364 = vrot.lane.b32.xlu0 %v1732, 120
  %v2365 = vpop.permute.xlu0 %2364
  %2366 = vrot.lane.b32.xlu0 %v1733, 120
  %v2367 = vpop.permute.xlu0 %2366
  %2368 = vrot.lane.b32.xlu0 %v1734, 120
  %v2369 = vpop.permute.xlu0 %2368
  %2370 = vrot.lane.b32.xlu0 %v1735, 120
  %v2371 = vpop.permute.xlu0 %2370
  %2372 = vrot.lane.b32.xlu0 %v1736, 120
  %v2373 = vpop.permute.xlu0 %2372
  %2374 = vrot.lane.b32.xlu0 %v1737, 120
  %v2375 = vpop.permute.xlu0 %2374
  %2376 = vrot.lane.b32.xlu0 %v1738, 120
  %v2377 = vpop.permute.xlu0 %2376
  %2378 = vrot.lane.b32.xlu0 %v1739, 120
  %v2379 = vpop.permute.xlu0 %2378
  %2412 = vrot.lane.b32.xlu0 %v1820, 120
  %v2413 = vpop.permute.xlu0 %2412
  %2414 = vrot.lane.b32.xlu0 %v1821, 120
  %v2415 = vpop.permute.xlu0 %2414
  %2416 = vrot.lane.b32.xlu0 %v1822, 120
  %v2417 = vpop.permute.xlu0 %2416
  %2418 = vrot.lane.b32.xlu0 %v1823, 120
  %v2419 = vpop.permute.xlu0 %2418
  %2420 = vrot.lane.b32.xlu0 %v1824, 120
  %v2421 = vpop.permute.xlu0 %2420
  %2422 = vrot.lane.b32.xlu0 %v1825, 120
  %v2423 = vpop.permute.xlu0 %2422
  %2424 = vrot.lane.b32.xlu0 %v1826, 120
  %v2425 = vpop.permute.xlu0 %2424
  %2426 = vrot.lane.b32.xlu0 %v1827, 120
  %v2427 = vpop.permute.xlu0 %2426
  %2428 = vrot.lane.b32.xlu0 %v1828, 120
  %v2429 = vpop.permute.xlu0 %2428
  %2430 = vrot.lane.b32.xlu0 %v1829, 120
  %v2431 = vpop.permute.xlu0 %2430
  %2432 = vrot.lane.b32.xlu0 %v1830, 120
  %v2433 = vpop.permute.xlu0 %2432
  %2434 = vrot.lane.b32.xlu0 %v1831, 120
  %v2435 = vpop.permute.xlu0 %2434
  %2436 = vrot.lane.b32.xlu0 %v1832, 120
  %v2437 = vpop.permute.xlu0 %2436
  %2438 = vrot.lane.b32.xlu0 %v1833, 120
  %v2439 = vpop.permute.xlu0 %2438
  %2440 = vrot.lane.b32.xlu0 %v1834, 120
  %v2441 = vpop.permute.xlu0 %2440
  %2442 = vrot.lane.b32.xlu0 %v1835, 120
  %v2443 = vpop.permute.xlu0 %2442
  %2476 = vrot.lane.b32.xlu0 %v1836, 122
  %v2477 = vpop.permute.xlu0 %2476
  %2478 = vrot.lane.b32.xlu0 %v1837, 122
  %v2479 = vpop.permute.xlu0 %2478
  %2480 = vrot.lane.b32.xlu0 %v1838, 122
  %v2481 = vpop.permute.xlu0 %2480
  %2482 = vrot.lane.b32.xlu0 %v1839, 122
  %v2483 = vpop.permute.xlu0 %2482
  %2484 = vrot.lane.b32.xlu0 %v1840, 122
  %v2485 = vpop.permute.xlu0 %2484
  %2486 = vrot.lane.b32.xlu0 %v1841, 122
  %v2487 = vpop.permute.xlu0 %2486
  %2488 = vrot.lane.b32.xlu0 %v1842, 122
  %v2489 = vpop.permute.xlu0 %2488
  %2490 = vrot.lane.b32.xlu0 %v1843, 122
  %v2491 = vpop.permute.xlu0 %2490
  %2492 = vrot.lane.b32.xlu0 %v1844, 122
  %v2493 = vpop.permute.xlu0 %2492
  %2494 = vrot.lane.b32.xlu0 %v1845, 122
  %v2495 = vpop.permute.xlu0 %2494
  %2496 = vrot.lane.b32.xlu0 %v1846, 122
  %v2497 = vpop.permute.xlu0 %2496
  %2498 = vrot.lane.b32.xlu0 %v1847, 122
  %v2499 = vpop.permute.xlu0 %2498
  %2500 = vrot.lane.b32.xlu0 %v1848, 122
  %v2501 = vpop.permute.xlu0 %2500
  %2502 = vrot.lane.b32.xlu0 %v1849, 122
  %v2503 = vpop.permute.xlu0 %2502
  %2504 = vrot.lane.b32.xlu0 %v1850, 122
  %v2505 = vpop.permute.xlu0 %2504
  %2506 = vrot.lane.b32.xlu0 %v1851, 122
  %v2507 = vpop.permute.xlu0 %2506
  %2540 = vrot.lane.b32.xlu0 %v1852, 122
  %v2541 = vpop.permute.xlu0 %2540
  %2542 = vrot.lane.b32.xlu0 %v1853, 122
  %v2543 = vpop.permute.xlu0 %2542
  %2544 = vrot.lane.b32.xlu0 %v1854, 122
  %v2545 = vpop.permute.xlu0 %2544
  %2546 = vrot.lane.b32.xlu0 %v1855, 122
  %v2547 = vpop.permute.xlu0 %2546
  %2548 = vrot.lane.b32.xlu0 %v1856, 122
  %v2549 = vpop.permute.xlu0 %2548
  %2550 = vrot.lane.b32.xlu0 %v1857, 122
  %v2551 = vpop.permute.xlu0 %2550
  %2552 = vrot.lane.b32.xlu0 %v1858, 122
  %v2553 = vpop.permute.xlu0 %2552
  %2554 = vrot.lane.b32.xlu0 %v1859, 122
  %v2555 = vpop.permute.xlu0 %2554
  %2556 = vrot.lane.b32.xlu0 %v1860, 122
  %v2557 = vpop.permute.xlu0 %2556
  %2558 = vrot.lane.b32.xlu0 %v1861, 122
  %v2559 = vpop.permute.xlu0 %2558
  %2560 = vrot.lane.b32.xlu0 %v1862, 122
  %v2561 = vpop.permute.xlu0 %2560
  %2562 = vrot.lane.b32.xlu0 %v1863, 122
  %v2563 = vpop.permute.xlu0 %2562
  %2564 = vrot.lane.b32.xlu0 %v1864, 122
  %v2565 = vpop.permute.xlu0 %2564
  %2566 = vrot.lane.b32.xlu0 %v1865, 122
  %v2567 = vpop.permute.xlu0 %2566
  %2568 = vrot.lane.b32.xlu0 %v1866, 122
  %v2569 = vpop.permute.xlu0 %2568
  %2570 = vrot.lane.b32.xlu0 %v1867, 122
  %v2571 = vpop.permute.xlu0 %2570
  %vm2588 = vcmask 7168
  %v2589 = vsel %vm2588, %v892, %v988
  %v2590 = vsel %vm2588, %v893, %v989
  %v2591 = vsel %vm2588, %v894, %v990
  %v2592 = vsel %vm2588, %v895, %v991
  %v2593 = vsel %vm2588, %v896, %v992
  %v2594 = vsel %vm2588, %v897, %v993
  %v2595 = vsel %vm2588, %v898, %v994
  %v2596 = vsel %vm2588, %v899, %v995
  %v2597 = vsel %vm2588, %v900, %v996
  %v2598 = vsel %vm2588, %v901, %v997
  %v2599 = vsel %vm2588, %v902, %v998
  %v2600 = vsel %vm2588, %v903, %v999
  %v2601 = vsel %vm2588, %v904, %v1000
  %v2602 = vsel %vm2588, %v905, %v1001
  %v2603 = vsel %vm2588, %v906, %v1002
  %v2604 = vsel %vm2588, %v907, %v1003
  %vm2605 = vcmask 15360
  %v2606 = vsel %vm2605, %v2589, %v1965
  %v2607 = vsel %vm2605, %v2590, %v1967
  %v2608 = vsel %vm2605, %v2591, %v1969
  %v2609 = vsel %vm2605, %v2592, %v1971
  %v2610 = vsel %vm2605, %v2593, %v1973
  %v2611 = vsel %vm2605, %v2594, %v1975
  %v2612 = vsel %vm2605, %v2595, %v1977
  %v2613 = vsel %vm2605, %v2596, %v1979
  %v2614 = vsel %vm2605, %v2597, %v1981
  %v2615 = vsel %vm2605, %v2598, %v1983
  %v2616 = vsel %vm2605, %v2599, %v1985
  %v2617 = vsel %vm2605, %v2600, %v1987
  %v2618 = vsel %vm2605, %v2601, %v1989
  %v2619 = vsel %vm2605, %v2602, %v1991
  %v2620 = vsel %vm2605, %v2603, %v1993
  %v2621 = vsel %vm2605, %v2604, %v1995
  %vm2622 = vcmask 23552
  %v2623 = vsel %vm2622, %v2606, %v2029
  %v2624 = vsel %vm2622, %v2607, %v2031
  %v2625 = vsel %vm2622, %v2608, %v2033
  %v2626 = vsel %vm2622, %v2609, %v2035
  %v2627 = vsel %vm2622, %v2610, %v2037
  %v2628 = vsel %vm2622, %v2611, %v2039
  %v2629 = vsel %vm2622, %v2612, %v2041
  %v2630 = vsel %vm2622, %v2613, %v2043
  %v2631 = vsel %vm2622, %v2614, %v2045
  %v2632 = vsel %vm2622, %v2615, %v2047
  %v2633 = vsel %vm2622, %v2616, %v2049
  %v2634 = vsel %vm2622, %v2617, %v2051
  %v2635 = vsel %vm2622, %v2618, %v2053
  %v2636 = vsel %vm2622, %v2619, %v2055
  %v2637 = vsel %vm2622, %v2620, %v2057
  %v2638 = vsel %vm2622, %v2621, %v2059
  %vm2639 = vcmask 31744
  %v2640 = vsel %vm2639, %v2623, %v2093
  %v2641 = vsel %vm2639, %v2624, %v2095
  %v2642 = vsel %vm2639, %v2625, %v2097
  %v2643 = vsel %vm2639, %v2626, %v2099
  %v2644 = vsel %vm2639, %v2627, %v2101
  %v2645 = vsel %vm2639, %v2628, %v2103
  %v2646 = vsel %vm2639, %v2629, %v2105
  %v2647 = vsel %vm2639, %v2630, %v2107
  %v2648 = vsel %vm2639, %v2631, %v2109
  %v2649 = vsel %vm2639, %v2632, %v2111
  %v2650 = vsel %vm2639, %v2633, %v2113
  %v2651 = vsel %vm2639, %v2634, %v2115
  %v2652 = vsel %vm2639, %v2635, %v2117
  %v2653 = vsel %vm2639, %v2636, %v2119
  %v2654 = vsel %vm2639, %v2637, %v2121
  %v2655 = vsel %vm2639, %v2638, %v2123
  %vm2656 = vcmask 39936
  %v2657 = vsel %vm2656, %v2640, %v2157
  %v2658 = vsel %vm2656, %v2641, %v2159
  %v2659 = vsel %vm2656, %v2642, %v2161
  %v2660 = vsel %vm2656, %v2643, %v2163
  %v2661 = vsel %vm2656, %v2644, %v2165
  %v2662 = vsel %vm2656, %v2645, %v2167
  %v2663 = vsel %vm2656, %v2646, %v2169
  %v2664 = vsel %vm2656, %v2647, %v2171
  %v2665 = vsel %vm2656, %v2648, %v2173
  %v2666 = vsel %vm2656, %v2649, %v2175
  %v2667 = vsel %vm2656, %v2650, %v2177
  %v2668 = vsel %vm2656, %v2651, %v2179
  %v2669 = vsel %vm2656, %v2652, %v2181
  %v2670 = vsel %vm2656, %v2653, %v2183
  %v2671 = vsel %vm2656, %v2654, %v2185
  %v2672 = vsel %vm2656, %v2655, %v2187
  %vm2673 = vcmask 48128
  %v2674 = vsel %vm2673, %v2657, %v2221
  %v2675 = vsel %vm2673, %v2658, %v2223
  %v2676 = vsel %vm2673, %v2659, %v2225
  %v2677 = vsel %vm2673, %v2660, %v2227
  %v2678 = vsel %vm2673, %v2661, %v2229
  %v2679 = vsel %vm2673, %v2662, %v2231
  %v2680 = vsel %vm2673, %v2663, %v2233
  %v2681 = vsel %vm2673, %v2664, %v2235
  %v2682 = vsel %vm2673, %v2665, %v2237
  %v2683 = vsel %vm2673, %v2666, %v2239
  %v2684 = vsel %vm2673, %v2667, %v2241
  %v2685 = vsel %vm2673, %v2668, %v2243
  %v2686 = vsel %vm2673, %v2669, %v2245
  %v2687 = vsel %vm2673, %v2670, %v2247
  %v2688 = vsel %vm2673, %v2671, %v2249
  %v2689 = vsel %vm2673, %v2672, %v2251
  %vm2690 = vcmask 56320
  %v2691 = vsel %vm2690, %v2674, %v2285
  %v2692 = vsel %vm2690, %v2675, %v2287
  %v2693 = vsel %vm2690, %v2676, %v2289
  %v2694 = vsel %vm2690, %v2677, %v2291
  %v2695 = vsel %vm2690, %v2678, %v2293
  %v2696 = vsel %vm2690, %v2679, %v2295
  %v2697 = vsel %vm2690, %v2680, %v2297
  %v2698 = vsel %vm2690, %v2681, %v2299
  %v2699 = vsel %vm2690, %v2682, %v2301
  %v2700 = vsel %vm2690, %v2683, %v2303
  %v2701 = vsel %vm2690, %v2684, %v2305
  %v2702 = vsel %vm2690, %v2685, %v2307
  %v2703 = vsel %vm2690, %v2686, %v2309
  %v2704 = vsel %vm2690, %v2687, %v2311
  %v2705 = vsel %vm2690, %v2688, %v2313
  %v2706 = vsel %vm2690, %v2689, %v2315
  %vm2707 = vcmask 64512
  %v2708 = vsel %vm2707, %v2691, %v2349
  %v2709 = vsel %vm2707, %v2692, %v2351
  %v2710 = vsel %vm2707, %v2693, %v2353
  %v2711 = vsel %vm2707, %v2694, %v2355
  %v2712 = vsel %vm2707, %v2695, %v2357
  %v2713 = vsel %vm2707, %v2696, %v2359
  %v2714 = vsel %vm2707, %v2697, %v2361
  %v2715 = vsel %vm2707, %v2698, %v2363
  %v2716 = vsel %vm2707, %v2699, %v2365
  %v2717 = vsel %vm2707, %v2700, %v2367
  %v2718 = vsel %vm2707, %v2701, %v2369
  %v2719 = vsel %vm2707, %v2702, %v2371
  %v2720 = vsel %vm2707, %v2703, %v2373
  %v2721 = vsel %vm2707, %v2704, %v2375
  %v2722 = vsel %vm2707, %v2705, %v2377
  %v2723 = vsel %vm2707, %v2706, %v2379
  %vm2724 = vcmask 72704
  %v2725 = vsel %vm2724, %v2708, %v2413
  %v2726 = vsel %vm2724, %v2709, %v2415
  %v2727 = vsel %vm2724, %v2710, %v2417
  %v2728 = vsel %vm2724, %v2711, %v2419
  %v2729 = vsel %vm2724, %v2712, %v2421
  %v2730 = vsel %vm2724, %v2713, %v2423
  %v2731 = vsel %vm2724, %v2714, %v2425
  %v2732 = vsel %vm2724, %v2715, %v2427
  %v2733 = vsel %vm2724, %v2716, %v2429
  %v2734 = vsel %vm2724, %v2717, %v2431
  %v2735 = vsel %vm2724, %v2718, %v2433
  %v2736 = vsel %vm2724, %v2719, %v2435
  %v2737 = vsel %vm2724, %v2720, %v2437
  %v2738 = vsel %vm2724, %v2721, %v2439
  %v2739 = vsel %vm2724, %v2722, %v2441
  %v2740 = vsel %vm2724, %v2723, %v2443
  %vm2741 = vcmask 80896
  %v2742 = vsel %vm2741, %v2725, %v2477
  %v2743 = vsel %vm2741, %v2726, %v2479
  %v2744 = vsel %vm2741, %v2727, %v2481
  %v2745 = vsel %vm2741, %v2728, %v2483
  %v2746 = vsel %vm2741, %v2729, %v2485
  %v2747 = vsel %vm2741, %v2730, %v2487
  %v2748 = vsel %vm2741, %v2731, %v2489
  %v2749 = vsel %vm2741, %v2732, %v2491
  %v2750 = vsel %vm2741, %v2733, %v2493
  %v2751 = vsel %vm2741, %v2734, %v2495
  %v2752 = vsel %vm2741, %v2735, %v2497
  %v2753 = vsel %vm2741, %v2736, %v2499
  %v2754 = vsel %vm2741, %v2737, %v2501
  %v2755 = vsel %vm2741, %v2738, %v2503
  %v2756 = vsel %vm2741, %v2739, %v2505
  %v2757 = vsel %vm2741, %v2740, %v2507
  %vm2758 = vcmask 89088
  %v2759 = vsel %vm2758, %v2742, %v2541
  %v2760 = vsel %vm2758, %v2743, %v2543
  %v2761 = vsel %vm2758, %v2744, %v2545
  %v2762 = vsel %vm2758, %v2745, %v2547
  %v2763 = vsel %vm2758, %v2746, %v2549
  %v2764 = vsel %vm2758, %v2747, %v2551
  %v2765 = vsel %vm2758, %v2748, %v2553
  %v2766 = vsel %vm2758, %v2749, %v2555
  %v2767 = vsel %vm2758, %v2750, %v2557
  %v2768 = vsel %vm2758, %v2751, %v2559
  %v2769 = vsel %vm2758, %v2752, %v2561
  %v2770 = vsel %vm2758, %v2753, %v2563
  %v2771 = vsel %vm2758, %v2754, %v2565
  %v2772 = vsel %vm2758, %v2755, %v2567
  %v2773 = vsel %vm2758, %v2756, %v2569
  %v2774 = vsel %vm2758, %v2757, %v2571
  %vm2775 = vcmask 97280
  %2776 = vst.msk [vmem:[%s6] sm:$0xff] %vm2775, %v2759
  %2777 = vst.msk [vmem:[%s6 + $0x8] sm:$0xff] %vm2775, %v2760
  %2778 = vst.msk [vmem:[%s6 + $0x10] sm:$0xff] %vm2775, %v2761
  %2779 = vst.msk [vmem:[%s6 + $0x18] sm:$0xff] %vm2775, %v2762
  %2780 = vst.msk [vmem:[%s6 + $0x20] sm:$0xff] %vm2775, %v2763
  %2781 = vst.msk [vmem:[%s6 + $0x28] sm:$0xff] %vm2775, %v2764
  %2782 = vst.msk [vmem:[%s6 + $0x30] sm:$0xff] %vm2775, %v2765
  %2783 = vst.msk [vmem:[%s6 + $0x38] sm:$0xff] %vm2775, %v2766
  %2784 = vst.msk [vmem:[%s6 + $0x40] sm:$0xff] %vm2775, %v2767
  %2785 = vst.msk [vmem:[%s6 + $0x48] sm:$0xff] %vm2775, %v2768
  %2786 = vst.msk [vmem:[%s6 + $0x50] sm:$0xff] %vm2775, %v2769
  %2787 = vst.msk [vmem:[%s6 + $0x58] sm:$0xff] %vm2775, %v2770
  %2788 = vst.msk [vmem:[%s6 + $0x60] sm:$0xff] %vm2775, %v2771
  %2789 = vst.msk [vmem:[%s6 + $0x68] sm:$0xff] %vm2775, %v2772
  %2790 = vst.msk [vmem:[%s6 + $0x70] sm:$0xff] %vm2775, %v2773
  %2791 = vst.msk [vmem:[%s6 + $0x78] sm:$0xff] %vm2775, %v2774
  %2808 = vrot.lane.b32.xlu0 %v1116, 123
  %v2809 = vpop.permute.xlu0 %2808
  %2810 = vrot.lane.b32.xlu0 %v1117, 123
  %v2811 = vpop.permute.xlu0 %2810
  %2812 = vrot.lane.b32.xlu0 %v1118, 123
  %v2813 = vpop.permute.xlu0 %2812
  %2814 = vrot.lane.b32.xlu0 %v1119, 123
  %v2815 = vpop.permute.xlu0 %2814
  %2816 = vrot.lane.b32.xlu0 %v1120, 123
  %v2817 = vpop.permute.xlu0 %2816
  %2818 = vrot.lane.b32.xlu0 %v1121, 123
  %v2819 = vpop.permute.xlu0 %2818
  %2820 = vrot.lane.b32.xlu0 %v1122, 123
  %v2821 = vpop.permute.xlu0 %2820
  %2822 = vrot.lane.b32.xlu0 %v1123, 123
  %v2823 = vpop.permute.xlu0 %2822
  %2824 = vrot.lane.b32.xlu0 %v1124, 123
  %v2825 = vpop.permute.xlu0 %2824
  %2826 = vrot.lane.b32.xlu0 %v1125, 123
  %v2827 = vpop.permute.xlu0 %2826
  %2828 = vrot.lane.b32.xlu0 %v1126, 123
  %v2829 = vpop.permute.xlu0 %2828
  %2830 = vrot.lane.b32.xlu0 %v1127, 123
  %v2831 = vpop.permute.xlu0 %2830
  %2832 = vrot.lane.b32.xlu0 %v1128, 123
  %v2833 = vpop.permute.xlu0 %2832
  %2834 = vrot.lane.b32.xlu0 %v1129, 123
  %v2835 = vpop.permute.xlu0 %2834
  %2836 = vrot.lane.b32.xlu0 %v1130, 123
  %v2837 = vpop.permute.xlu0 %2836
  %2838 = vrot.lane.b32.xlu0 %v1131, 123
  %v2839 = vpop.permute.xlu0 %2838
  %2872 = vrot.lane.b32.xlu0 %v1532, 118
  %v2873 = vpop.permute.xlu0 %2872
  %2874 = vrot.lane.b32.xlu0 %v1533, 118
  %v2875 = vpop.permute.xlu0 %2874
  %2876 = vrot.lane.b32.xlu0 %v1534, 118
  %v2877 = vpop.permute.xlu0 %2876
  %2878 = vrot.lane.b32.xlu0 %v1535, 118
  %v2879 = vpop.permute.xlu0 %2878
  %2880 = vrot.lane.b32.xlu0 %v1536, 118
  %v2881 = vpop.permute.xlu0 %2880
  %2882 = vrot.lane.b32.xlu0 %v1537, 118
  %v2883 = vpop.permute.xlu0 %2882
  %2884 = vrot.lane.b32.xlu0 %v1538, 118
  %v2885 = vpop.permute.xlu0 %2884
  %2886 = vrot.lane.b32.xlu0 %v1539, 118
  %v2887 = vpop.permute.xlu0 %2886
  %2888 = vrot.lane.b32.xlu0 %v1540, 118
  %v2889 = vpop.permute.xlu0 %2888
  %2890 = vrot.lane.b32.xlu0 %v1541, 118
  %v2891 = vpop.permute.xlu0 %2890
  %2892 = vrot.lane.b32.xlu0 %v1542, 118
  %v2893 = vpop.permute.xlu0 %2892
  %2894 = vrot.lane.b32.xlu0 %v1543, 118
  %v2895 = vpop.permute.xlu0 %2894
  %2896 = vrot.lane.b32.xlu0 %v1544, 118
  %v2897 = vpop.permute.xlu0 %2896
  %2898 = vrot.lane.b32.xlu0 %v1545, 118
  %v2899 = vpop.permute.xlu0 %2898
  %2900 = vrot.lane.b32.xlu0 %v1546, 118
  %v2901 = vpop.permute.xlu0 %2900
  %2902 = vrot.lane.b32.xlu0 %v1547, 118
  %v2903 = vpop.permute.xlu0 %2902
  %2936 = vrot.lane.b32.xlu0 %v1932, 113
  %v2937 = vpop.permute.xlu0 %2936
  %2938 = vrot.lane.b32.xlu0 %v1933, 113
  %v2939 = vpop.permute.xlu0 %2938
  %2940 = vrot.lane.b32.xlu0 %v1934, 113
  %v2941 = vpop.permute.xlu0 %2940
  %2942 = vrot.lane.b32.xlu0 %v1935, 113
  %v2943 = vpop.permute.xlu0 %2942
  %2944 = vrot.lane.b32.xlu0 %v1936, 113
  %v2945 = vpop.permute.xlu0 %2944
  %2946 = vrot.lane.b32.xlu0 %v1937, 113
  %v2947 = vpop.permute.xlu0 %2946
  %2948 = vrot.lane.b32.xlu0 %v1938, 113
  %v2949 = vpop.permute.xlu0 %2948
  %2950 = vrot.lane.b32.xlu0 %v1939, 113
  %v2951 = vpop.permute.xlu0 %2950
  %2952 = vrot.lane.b32.xlu0 %v1940, 113
  %v2953 = vpop.permute.xlu0 %2952
  %2954 = vrot.lane.b32.xlu0 %v1941, 113
  %v2955 = vpop.permute.xlu0 %2954
  %2956 = vrot.lane.b32.xlu0 %v1942, 113
  %v2957 = vpop.permute.xlu0 %2956
  %2958 = vrot.lane.b32.xlu0 %v1943, 113
  %v2959 = vpop.permute.xlu0 %2958
  %2960 = vrot.lane.b32.xlu0 %v1944, 113
  %v2961 = vpop.permute.xlu0 %2960
  %2962 = vrot.lane.b32.xlu0 %v1945, 113
  %v2963 = vpop.permute.xlu0 %2962
  %2964 = vrot.lane.b32.xlu0 %v1946, 113
  %v2965 = vpop.permute.xlu0 %2964
  %2966 = vrot.lane.b32.xlu0 %v1947, 113
  %v2967 = vpop.permute.xlu0 %2966
  %v2984 = vsel %vm2622, %v2809, %v2873
  %v2985 = vsel %vm2622, %v2811, %v2875
  %v2986 = vsel %vm2622, %v2813, %v2877
  %v2987 = vsel %vm2622, %v2815, %v2879
  %v2988 = vsel %vm2622, %v2817, %v2881
  %v2989 = vsel %vm2622, %v2819, %v2883
  %v2990 = vsel %vm2622, %v2821, %v2885
  %v2991 = vsel %vm2622, %v2823, %v2887
  %v2992 = vsel %vm2622, %v2825, %v2889
  %v2993 = vsel %vm2622, %v2827, %v2891
  %v2994 = vsel %vm2622, %v2829, %v2893
  %v2995 = vsel %vm2622, %v2831, %v2895
  %v2996 = vsel %vm2622, %v2833, %v2897
  %v2997 = vsel %vm2622, %v2835, %v2899
  %v2998 = vsel %vm2622, %v2837, %v2901
  %v2999 = vsel %vm2622, %v2839, %v2903
  %v3000 = vsel %vm2673, %v2984, %v2937
  %v3001 = vsel %vm2673, %v2985, %v2939
  %v3002 = vsel %vm2673, %v2986, %v2941
  %v3003 = vsel %vm2673, %v2987, %v2943
  %v3004 = vsel %vm2673, %v2988, %v2945
  %v3005 = vsel %vm2673, %v2989, %v2947
  %v3006 = vsel %vm2673, %v2990, %v2949
  %v3007 = vsel %vm2673, %v2991, %v2951
  %v3008 = vsel %vm2673, %v2992, %v2953
  %v3009 = vsel %vm2673, %v2993, %v2955
  %v3010 = vsel %vm2673, %v2994, %v2957
  %v3011 = vsel %vm2673, %v2995, %v2959
  %v3012 = vsel %vm2673, %v2996, %v2961
  %v3013 = vsel %vm2673, %v2997, %v2963
  %v3014 = vsel %vm2673, %v2998, %v2965
  %v3015 = vsel %vm2673, %v2999, %v2967
  %3016 = vst.msk [vmem:[%s7] sm:$0xff] %vm2724, %v3000
  %3017 = vst.msk [vmem:[%s7 + $0x8] sm:$0xff] %vm2724, %v3001
  %3018 = vst.msk [vmem:[%s7 + $0x10] sm:$0xff] %vm2724, %v3002
  %3019 = vst.msk [vmem:[%s7 + $0x18] sm:$0xff] %vm2724, %v3003
  %3020 = vst.msk [vmem:[%s7 + $0x20] sm:$0xff] %vm2724, %v3004
  %3021 = vst.msk [vmem:[%s7 + $0x28] sm:$0xff] %vm2724, %v3005
  %3022 = vst.msk [vmem:[%s7 + $0x30] sm:$0xff] %vm2724, %v3006
  %3023 = vst.msk [vmem:[%s7 + $0x38] sm:$0xff] %vm2724, %v3007
  %3024 = vst.msk [vmem:[%s7 + $0x40] sm:$0xff] %vm2724, %v3008
  %3025 = vst.msk [vmem:[%s7 + $0x48] sm:$0xff] %vm2724, %v3009
  %3026 = vst.msk [vmem:[%s7 + $0x50] sm:$0xff] %vm2724, %v3010
  %3027 = vst.msk [vmem:[%s7 + $0x58] sm:$0xff] %vm2724, %v3011
  %3028 = vst.msk [vmem:[%s7 + $0x60] sm:$0xff] %vm2724, %v3012
  %3029 = vst.msk [vmem:[%s7 + $0x68] sm:$0xff] %vm2724, %v3013
  %3030 = vst.msk [vmem:[%s7 + $0x70] sm:$0xff] %vm2724, %v3014
  %3031 = vst.msk [vmem:[%s7 + $0x78] sm:$0xff] %vm2724, %v3015
  // Predicated region
  $region26: #{tpu_custom_call.1} parent=0 // pred_check
    _
  $region27: #{tpu_custom_call.1} parent=0 // pred_check_branch
    %3033 = sbr.rel (0) target = $region29
  $region28: #{tpu_custom_call.1} parent=0 // pred_region
    _
  $region29: #{tpu_custom_call.1} parent=0 // pred_fallthru
    _
  // Predicated region
  $region30: #{tpu_custom_call.1} parent=0 // pred_check
    _
  $region31: #{tpu_custom_call.1} parent=0 // pred_check_branch
    %3035 = sbr.rel (0) target = $region33
  $region32: #{tpu_custom_call.1} parent=0 // pred_region
    _
  $region33: #{tpu_custom_call.1} parent=0 // pred_fallthru
    _
  // Predicated region
  $region34: #{tpu_custom_call.1} parent=0 // pred_check
    _
  $region35: #{tpu_custom_call.1} parent=0 // pred_check_branch
    %3037 = sbr.rel (0) target = $region37
  $region36: #{tpu_custom_call.1} parent=0 // pred_region
    _
  $region37: #{tpu_custom_call.1} parent=0 // pred_fallthru
    _
  // Predicated region
  $region38: #{tpu_custom_call.1} parent=0 // pred_check
    _
  $region39: #{tpu_custom_call.1} parent=0 // pred_check_branch
    %3039 = sbr.rel (0) target = $region41
  $region40: #{tpu_custom_call.1} parent=0 // pred_region
    _
  $region41: #{tpu_custom_call.1} parent=0 // pred_fallthru
    _

</llo_original>
